<compile_context>
chip_gen: v7x
topology: tpu7x:2x2x1
jax: 0.10.0
libtpu: 0.0.40
codegen_flags: <defaults>
</compile_context>

<pallas_src>
from functools import partial

import jax
import jax.numpy as jnp
import numpy as np
from jax.experimental import pallas as pl
from jax.experimental.pallas import tpu as pltpu


def context_block_kernel(x_ref, wm_ref, bm_ref, w1_ref, b1_ref,
                         g_ref, beta_ref, w2_ref, b2_ref,
                         out_ref, atten_ref, p_row_sc, p_col_sc):
    r = pl.program_id(1)
    t_rows = atten_ref.shape[0]

    # ---- once per batch element: mask, softmax, pooling, MLP, residual -----
    @pl.when(r == 0)
    def _():
        x = x_ref[...]                                            # (C, HW)

        # conv_mask (1x1 conv, single output channel): (1,C) @ (C,HW) on MXU.
        logits = jnp.dot(wm_ref[...], x,
                         preferred_element_type=jnp.float32) + bm_ref[0, 0]

        # Softmax over the spatial axis (dim=2 of the PyTorch module).
        m = jnp.max(logits, axis=-1, keepdims=True)
        e = jnp.exp(logits - m)
        s = jnp.sum(e, axis=-1, keepdims=True)
        p = e * pl.reciprocal(s)                                  # exact; (1, HW)
        p_row_sc[...] = p

        # Column copy of p: outer(p^T, [1.0]) via a tiny K=1 matmul.  This is
        # the row->column relayout needed for the VPU outer-product tiles and
        # for the canonical (C,HW)@(HW,1) pooling matmul below.
        p_col = jax.lax.dot_general(
            p, jnp.ones((1, 1), jnp.float32),
            dimension_numbers=(((0,), (0,)), ((), ())),
            preferred_element_type=jnp.float32)                   # (HW, 1)
        p_col_sc[...] = p_col

        # Global-context pooling: contract the large HW axis on the MXU.
        context = jnp.dot(x, p_col, preferred_element_type=jnp.float32)  # (C,1)

        # channel_add_conv: 1x1 conv -> LayerNorm([P,1,1]) -> ReLU -> 1x1 conv.
        y1 = jnp.dot(w1_ref[...], context,
                     preferred_element_type=jnp.float32) + b1_ref[...]   # (P,1)
        mu = jnp.mean(y1, keepdims=True)                          # LN over all P
        var = jnp.mean((y1 - mu) ** 2, keepdims=True)
        y1 = (y1 - mu) * jax.lax.rsqrt(var + 1e-5)
        y1 = y1 * g_ref[...] + beta_ref[...]
        y1 = jnp.maximum(y1, 0.0)                                 # ReLU
        y2 = jnp.dot(w2_ref[...], y1,
                     preferred_element_type=jnp.float32) + b2_ref[...]   # (C,1)

        # Residual broadcast-add; out block is resident across the r axis and
        # only needs to be written once per batch element.
        out_ref[...] = x + y2

    # ---- every step: one lane-dense row tile of atten = outer(p, p) --------
    start = pl.multiple_of(r * t_rows, t_rows)
    col = p_col_sc[pl.ds(start, t_rows), :]                       # (t_rows, 1)
    atten_ref[...] = col * p_row_sc[...]                          # VPU broadcast mul


def _pick_row_tile(hw, max_tile_bytes=1 << 20):
    """Largest multiple-of-8 divisor of hw whose (t, hw) f32 tile fits budget."""
    cap = max(8, min(hw, max_tile_bytes // (4 * hw)))
    cap -= cap % 8
    if cap >= hw:
        return hw
    for t in range(cap, 7, -8):
        if hw % t == 0:
            return t
    return hw


@partial(jax.jit, static_argnames=("row_tile",))
def _context_block_2d(x, wm, bm, w1, b1, gamma, beta, w2, b2, *, row_tile):
    B, C, H, W = x.shape
    HW = H * W
    P = w1.shape[0]
    t = row_tile

    x_flat = x.reshape(B, C, HW).astype(jnp.float32)
    wm = wm.reshape(1, C).astype(jnp.float32)
    bm = bm.reshape(1, 1).astype(jnp.float32)
    w1 = w1.astype(jnp.float32)                                   # (P, C)
    b1 = b1.reshape(P, 1).astype(jnp.float32)
    gamma = gamma.reshape(P, 1).astype(jnp.float32)
    beta = beta.reshape(P, 1).astype(jnp.float32)
    w2 = w2.astype(jnp.float32)                                   # (C, P)
    b2 = b2.reshape(C, 1).astype(jnp.float32)

    # Explicit VMEM budget: double-buffered x / out / atten blocks + padded
    # softmax scratch + params; clamp so the same kernel fits v7x's 64 MiB.
    scratch_bytes = 4096 * (-(-HW // 128) + -(-HW // 8))
    param_bytes = 4 * 2 * (C + P * C + C * P + 4 * P + 2 * C)
    est = 4 * 2 * (C * HW + C * HW + t * HW) + scratch_bytes + param_bytes
    vmem_limit = int(min(max(2 * est, 32 * 1024 * 1024), 48 * 1024 * 1024))

    out_flat, atten = pl.pallas_call(
        context_block_kernel,
        out_shape=(jax.ShapeDtypeStruct((B, C, HW), jnp.float32),
                   jax.ShapeDtypeStruct((B, HW, HW), jnp.float32)),
        grid_spec=pltpu.PrefetchScalarGridSpec(
            num_scalar_prefetch=0,
            grid=(B, HW // t),
            in_specs=[
                pl.BlockSpec((None, C, HW), lambda b, r: (b, 0, 0)),    # x
                pl.BlockSpec((1, C), lambda b, r: (0, 0)),              # conv_mask w
                pl.BlockSpec(memory_space=pltpu.MemorySpace.SMEM),      # conv_mask b (scalar)
                pl.BlockSpec((P, C), lambda b, r: (0, 0)),              # conv1 w
                pl.BlockSpec((P, 1), lambda b, r: (0, 0)),              # conv1 b
                pl.BlockSpec((P, 1), lambda b, r: (0, 0)),              # LN gamma
                pl.BlockSpec((P, 1), lambda b, r: (0, 0)),              # LN beta
                pl.BlockSpec((C, P), lambda b, r: (0, 0)),              # conv2 w
                pl.BlockSpec((C, 1), lambda b, r: (0, 0)),              # conv2 b
            ],
            out_specs=(
                pl.BlockSpec((None, C, HW), lambda b, r: (b, 0, 0)),    # out (resident over r)
                pl.BlockSpec((None, t, HW), lambda b, r: (b, r, 0)),    # atten row tile
            ),
            scratch_shapes=[pltpu.VMEM((1, HW), jnp.float32),           # softmax row
                            pltpu.VMEM((HW, 1), jnp.float32)],          # softmax column
        ),
        compiler_params=pltpu.CompilerParams(
            dimension_semantics=("parallel", "arbitrary"),
            vmem_limit_bytes=vmem_limit),
        input_output_aliases={0: 0},      # out shares x's HBM buffer (residual add)
    )(x_flat, wm, bm, w1, b1, gamma, beta, w2, b2)

    return out_flat.reshape(B, C, H, W), atten


def context_block_2d(x, params, row_tile=None):
    """x: (B, C, H, W) float32 (NCHW, like PyTorch). Returns (out, atten)."""
    _, _, H, W = x.shape
    hw = H * W
    if row_tile is None:
        row_tile = _pick_row_tile(hw)
    assert hw % row_tile == 0 and (row_tile % 8 == 0 or row_tile == hw)
    return _context_block_2d(x, params["wm"], params["bm"], params["w1"],
                             params["b1"], params["gamma"], params["beta"],
                             params["w2"], params["b2"], row_tile=row_tile)


def context_block_2d_ref(x, params):
    """Pure-JAX reference mirroring the PyTorch forward."""
    B, C, H, W = x.shape
    HW = H * W
    xf = x.reshape(B, C, HW)
    logits = jnp.einsum('c,bcs->bs', params["wm"], xf) + params["bm"]
    p = jax.nn.softmax(logits, axis=-1)                       # (B, HW)
    atten = jnp.einsum('bi,bj->bij', p, p)                    # (B, HW, HW)
    context = jnp.einsum('bcs,bs->bc', xf, p)                 # (B, C)
    y1 = jnp.einsum('pc,bc->bp', params["w1"], context) + params["b1"]
    mu = jnp.mean(y1, axis=-1, keepdims=True)
    var = jnp.mean((y1 - mu) ** 2, axis=-1, keepdims=True)
    y1 = (y1 - mu) / jnp.sqrt(var + 1e-5) * params["gamma"] + params["beta"]
    y1 = jnp.maximum(y1, 0.0)
    y2 = jnp.einsum('cp,bp->bc', params["w2"], y1) + params["b2"]
    out = x + y2[:, :, None, None]
    return out, atten


if __name__ == "__main__":
    B, C, P, H, W = 2, 4, 8, 16, 16      # inplanes=C, planes=P

    key = jax.random.PRNGKey(0)
    kx, k0, k1, k2, k3, k4, k5, k6, k7 = jax.random.split(key, 9)

    x = jax.random.normal(kx, (B, C, H, W), dtype=jnp.float32)

    # Deterministic synthetic parameters (shapes follow the module's __init__;
    # values are random so the compute path is exercised instead of the
    # zero-initialized last conv of the original init scheme).
    params = {
        "wm":    0.2 * jax.random.normal(k0, (C,), dtype=jnp.float32),
        "bm":    0.05 * jax.random.normal(k1, (1,), dtype=jnp.float32),
        "w1":    0.3 * jax.random.normal(k2, (P, C), dtype=jnp.float32),
        "b1":    0.1 * jax.random.normal(k3, (P,), dtype=jnp.float32),
        "gamma": 1.0 + 0.1 * jax.random.normal(k4, (P,), dtype=jnp.float32),
        "beta":  0.1 * jax.random.normal(k5, (P,), dtype=jnp.float32),
        "w2":    0.3 * jax.random.normal(k6, (C, P), dtype=jnp.float32),
        "b2":    0.1 * jax.random.normal(k7, (C,), dtype=jnp.float32),
    }

    out_expect, atten_expect = jax.block_until_ready(context_block_2d_ref(x, params))

    # row_tile=128 exercises the tiled-attention path (HW=256 -> 2 row tiles / batch).
    out, atten = jax.block_until_ready(context_block_2d(x, params, row_tile=128))

    np.testing.assert_allclose(np.asarray(out), np.asarray(out_expect),
                               rtol=1e-5, atol=1e-5)
    np.testing.assert_allclose(np.asarray(atten), np.asarray(atten_expect),
                               rtol=1e-5, atol=1e-6)
    print("KERNEL_OK")
</pallas_src>

<mosaic_0001>
module attributes {stable_mosaic.version = 11 : i64} {
  func.func @context_block_kernel(%arg0: i32, %arg1: i32, %arg2: memref<1x4x256xf32, #tpu.memory_space<vmem>>, %arg3: memref<1x4xf32, #tpu.memory_space<vmem>>, %arg4: memref<1x1xf32, #tpu.memory_space<smem>>, %arg5: memref<8x4xf32, #tpu.memory_space<vmem>>, %arg6: memref<8x1xf32, #tpu.memory_space<vmem>>, %arg7: memref<8x1xf32, #tpu.memory_space<vmem>>, %arg8: memref<8x1xf32, #tpu.memory_space<vmem>>, %arg9: memref<4x8xf32, #tpu.memory_space<vmem>>, %arg10: memref<4x1xf32, #tpu.memory_space<vmem>>, %arg11: memref<1x4x256xf32, #tpu.memory_space<vmem>>, %arg12: memref<1x128x256xf32, #tpu.memory_space<vmem>>, %arg13: memref<1x256xf32, #tpu.memory_space<vmem>>, %arg14: memref<256x1xf32, #tpu.memory_space<vmem>>) attributes {dimension_semantics = [#tpu.dimension_semantics<parallel>, #tpu.dimension_semantics<arbitrary>], iteration_bounds = array<i64: 2, 2>, scalar_prefetch = 0 : i64, scratch_operands = 2 : i64, tpu.core_type = #tpu.core_type<tc>, window_params = [{transform_indices = @transform_0, window_bounds = array<i64: 1, 4, 256>}, {pipeline_mode = #tpu.pipeline_mode<synchronous>, transform_indices = @transform_1, window_bounds = array<i64: 1, 4>}, {transform_indices = @transform_2, window_bounds = array<i64: 1, 1>}, {pipeline_mode = #tpu.pipeline_mode<synchronous>, transform_indices = @transform_3, window_bounds = array<i64: 8, 4>}, {pipeline_mode = #tpu.pipeline_mode<synchronous>, transform_indices = @transform_4, window_bounds = array<i64: 8, 1>}, {pipeline_mode = #tpu.pipeline_mode<synchronous>, transform_indices = @transform_5, window_bounds = array<i64: 8, 1>}, {pipeline_mode = #tpu.pipeline_mode<synchronous>, transform_indices = @transform_6, window_bounds = array<i64: 8, 1>}, {pipeline_mode = #tpu.pipeline_mode<synchronous>, transform_indices = @transform_7, window_bounds = array<i64: 4, 8>}, {pipeline_mode = #tpu.pipeline_mode<synchronous>, transform_indices = @transform_8, window_bounds = array<i64: 4, 1>}, {transform_indices = @transform_9, window_bounds = array<i64: 1, 4, 256>}, {transform_indices = @transform_10, window_bounds = array<i64: 1, 128, 256>}]} {
    %c0_i32 = arith.constant 0 : i32
    %0 = arith.cmpi eq, %arg1, %c0_i32 : i32
    %1 = arith.extui %0 : i1 to i32
    %c0_i32_0 = arith.constant 0 : i32
    %2 = arith.cmpi ne, %1, %c0_i32_0 : i32
    scf.if %2 {
      %c0_6 = arith.constant 0 : index
      %c0_7 = arith.constant 0 : index
      %c0_8 = arith.constant 0 : index
      %14 = vector.load %arg2[%c0_6, %c0_7, %c0_8] : memref<1x4x256xf32, #tpu.memory_space<vmem>>, vector<1x4x256xf32>
      %15 = vector.shape_cast %14 : vector<1x4x256xf32> to vector<4x256xf32>
      %c0_9 = arith.constant 0 : index
      %c0_10 = arith.constant 0 : index
      %16 = vector.load %arg3[%c0_9, %c0_10] : memref<1x4xf32, #tpu.memory_space<vmem>>, vector<1x4xf32>
      %cst = arith.constant dense<0.000000e+00> : vector<1x256xf32>
      %17 = tpu.matmul %16, %15, %cst {dimension_numbers = #tpu.dot_dimension_numbers<[1], [0], [0], [1], [0, 0, 1, 1], [], []>} : vector<1x4xf32>, vector<4x256xf32>, vector<1x256xf32> -> vector<1x256xf32>
      %c0_11 = arith.constant 0 : index
      %c0_12 = arith.constant 0 : index
      %18 = memref.load %arg4[%c0_11, %c0_12] : memref<1x1xf32, #tpu.memory_space<smem>>
      %19 = vector.broadcast %18 : f32 to vector<1x256xf32>
      %20 = arith.addf %17, %19 : vector<1x256xf32>
      %cst_13 = arith.constant dense<0xFF800000> : vector<1xf32>
      %21 = vector.multi_reduction <maximumf>, %20, %cst_13 [1] : vector<1x256xf32> to vector<1xf32>
      %22 = vector.shape_cast %21 : vector<1xf32> to vector<1x1xf32>
      %23 = vector.broadcast %22 : vector<1x1xf32> to vector<1x256xf32>
      %24 = arith.subf %20, %23 : vector<1x256xf32>
      %25 = math.exp %24 : vector<1x256xf32>
      %cst_14 = arith.constant dense<0.000000e+00> : vector<1xf32>
      %26 = vector.multi_reduction <add>, %25, %cst_14 [1] : vector<1x256xf32> to vector<1xf32>
      %27 = vector.shape_cast %26 : vector<1xf32> to vector<1x1xf32>
      %28 = tpu.reciprocal %27 : vector<1x1xf32> -> vector<1x1xf32>
      %29 = vector.broadcast %28 : vector<1x1xf32> to vector<1x256xf32>
      %30 = arith.mulf %25, %29 : vector<1x256xf32>
      %c0_15 = arith.constant 0 : index
      %c0_16 = arith.constant 0 : index
      %31 = vector.load %arg13[%c0_15, %c0_16] : memref<1x256xf32, #tpu.memory_space<vmem>>, vector<1x256xf32>
      tpu.vector_store %arg13[%c0_15, %c0_16], %30 {strides = array<i32>} : memref<1x256xf32, #tpu.memory_space<vmem>>, vector<1x256xf32>,
      %cst_17 = arith.constant 1.000000e+00 : f32
      %32 = vector.broadcast %cst_17 : f32 to vector<1x1xf32>
      %cst_18 = arith.constant dense<0.000000e+00> : vector<256x1xf32>
      %33 = tpu.matmul %30, %32, %cst_18 {dimension_numbers = #tpu.dot_dimension_numbers<[0], [0], [1], [1], [0, 1, 1, 1], [], []>} : vector<1x256xf32>, vector<1x1xf32>, vector<256x1xf32> -> vector<256x1xf32>
      %c0_19 = arith.constant 0 : index
      %c0_20 = arith.constant 0 : index
      %34 = vector.load %arg14[%c0_19, %c0_20] : memref<256x1xf32, #tpu.memory_space<vmem>>, vector<256x1xf32>
      tpu.vector_store %arg14[%c0_19, %c0_20], %33 {strides = array<i32>} : memref<256x1xf32, #tpu.memory_space<vmem>>, vector<256x1xf32>,
      %cst_21 = arith.constant dense<0.000000e+00> : vector<4x1xf32>
      %35 = tpu.matmul %15, %33, %cst_21 {dimension_numbers = #tpu.dot_dimension_numbers<[1], [0], [0], [1], [0, 0, 1, 1], [], []>} : vector<4x256xf32>, vector<256x1xf32>, vector<4x1xf32> -> vector<4x1xf32>
      %c0_22 = arith.constant 0 : index
      %c0_23 = arith.constant 0 : index
      %36 = vector.load %arg5[%c0_22, %c0_23] : memref<8x4xf32, #tpu.memory_space<vmem>>, vector<8x4xf32>
      %cst_24 = arith.constant dense<0.000000e+00> : vector<8x1xf32>
      %37 = tpu.matmul %36, %35, %cst_24 {dimension_numbers = #tpu.dot_dimension_numbers<[1], [0], [0], [1], [0, 0, 1, 1], [], []>} : vector<8x4xf32>, vector<4x1xf32>, vector<8x1xf32> -> vector<8x1xf32>
      %c0_25 = arith.constant 0 : index
      %c0_26 = arith.constant 0 : index
      %38 = vector.load %arg6[%c0_25, %c0_26] : memref<8x1xf32, #tpu.memory_space<vmem>>, vector<8x1xf32>
      %39 = arith.addf %37, %38 : vector<8x1xf32>
      %40 = vector.shape_cast %39 : vector<8x1xf32> to vector<1x8x1xf32>
      %cst_27 = arith.constant dense<0.000000e+00> : vector<1xf32>
      %41 = vector.multi_reduction <add>, %40, %cst_27 [1, 2] : vector<1x8x1xf32> to vector<1xf32>
      %42 = vector.shape_cast %41 : vector<1xf32> to vector<1x1x1xf32>
      %43 = vector.extract %42[0, 0, 0] : f32 from vector<1x1x1xf32>
      %44 = vector.broadcast %43 : f32 to vector<1x1xf32>
      %cst_28 = arith.constant 8.000000e+00 : f32
      %45 = vector.broadcast %cst_28 : f32 to vector<1x1xf32>
      %46 = arith.divf %44, %45 : vector<1x1xf32>
      %47 = vector.broadcast %46 : vector<1x1xf32> to vector<8x1xf32>
      %48 = arith.subf %39, %47 : vector<8x1xf32>
      %49 = arith.mulf %48, %48 : vector<8x1xf32>
      %50 = vector.shape_cast %49 : vector<8x1xf32> to vector<1x8x1xf32>
      %cst_29 = arith.constant dense<0.000000e+00> : vector<1xf32>
      %51 = vector.multi_reduction <add>, %50, %cst_29 [1, 2] : vector<1x8x1xf32> to vector<1xf32>
      %52 = vector.shape_cast %51 : vector<1xf32> to vector<1x1x1xf32>
      %53 = vector.extract %52[0, 0, 0] : f32 from vector<1x1x1xf32>
      %54 = vector.broadcast %53 : f32 to vector<1x1xf32>
      %cst_30 = arith.constant 8.000000e+00 : f32
      %55 = vector.broadcast %cst_30 : f32 to vector<1x1xf32>
      %56 = arith.divf %54, %55 : vector<1x1xf32>
      %57 = vector.broadcast %46 : vector<1x1xf32> to vector<8x1xf32>
      %58 = arith.subf %39, %57 : vector<8x1xf32>
      %cst_31 = arith.constant 9.99999974E-6 : f32
      %59 = vector.broadcast %cst_31 : f32 to vector<1x1xf32>
      %60 = arith.addf %56, %59 : vector<1x1xf32>
      %61 = math.rsqrt %60 : vector<1x1xf32>
      %62 = vector.broadcast %61 : vector<1x1xf32> to vector<8x1xf32>
      %63 = arith.mulf %58, %62 : vector<8x1xf32>
      %c0_32 = arith.constant 0 : index
      %c0_33 = arith.constant 0 : index
      %64 = vector.load %arg7[%c0_32, %c0_33] : memref<8x1xf32, #tpu.memory_space<vmem>>, vector<8x1xf32>
      %65 = arith.mulf %63, %64 : vector<8x1xf32>
      %c0_34 = arith.constant 0 : index
      %c0_35 = arith.constant 0 : index
      %66 = vector.load %arg8[%c0_34, %c0_35] : memref<8x1xf32, #tpu.memory_space<vmem>>, vector<8x1xf32>
      %67 = arith.addf %65, %66 : vector<8x1xf32>
      %cst_36 = arith.constant 0.000000e+00 : f32
      %68 = vector.broadcast %cst_36 : f32 to vector<8x1xf32>
      %69 = arith.maximumf %67, %68 : vector<8x1xf32>
      %c0_37 = arith.constant 0 : index
      %c0_38 = arith.constant 0 : index
      %70 = vector.load %arg9[%c0_37, %c0_38] : memref<4x8xf32, #tpu.memory_space<vmem>>, vector<4x8xf32>
      %cst_39 = arith.constant dense<0.000000e+00> : vector<4x1xf32>
      %71 = tpu.matmul %70, %69, %cst_39 {dimension_numbers = #tpu.dot_dimension_numbers<[1], [0], [0], [1], [0, 0, 1, 1], [], []>} : vector<4x8xf32>, vector<8x1xf32>, vector<4x1xf32> -> vector<4x1xf32>
      %c0_40 = arith.constant 0 : index
      %c0_41 = arith.constant 0 : index
      %72 = vector.load %arg10[%c0_40, %c0_41] : memref<4x1xf32, #tpu.memory_space<vmem>>, vector<4x1xf32>
      %73 = arith.addf %71, %72 : vector<4x1xf32>
      %74 = vector.broadcast %73 : vector<4x1xf32> to vector<4x256xf32>
      %75 = arith.addf %15, %74 : vector<4x256xf32>
      %c0_42 = arith.constant 0 : index
      %c0_43 = arith.constant 0 : index
      %c0_44 = arith.constant 0 : index
      %76 = vector.load %arg11[%c0_42, %c0_43, %c0_44] : memref<1x4x256xf32, #tpu.memory_space<vmem>>, vector<1x4x256xf32>
      %77 = vector.shape_cast %76 : vector<1x4x256xf32> to vector<4x256xf32>
      %78 = vector.shape_cast %75 : vector<4x256xf32> to vector<1x4x256xf32>
      tpu.vector_store %arg11[%c0_42, %c0_43, %c0_44], %78 {strides = array<i32>} : memref<1x4x256xf32, #tpu.memory_space<vmem>>, vector<1x4x256xf32>,
    } else {
    }
    %c128_i32 = arith.constant 128 : i32
    %3 = arith.muli %arg1, %c128_i32 : i32
    %4 = tpu.assume_multiple %3, 128 : i32
    %5 = arith.index_cast %4 : i32 to index
    %c0 = arith.constant 0 : index
    %6 = vector.load %arg14[%5, %c0] : memref<256x1xf32, #tpu.memory_space<vmem>>, vector<128x1xf32>
    %c0_1 = arith.constant 0 : index
    %c0_2 = arith.constant 0 : index
    %7 = vector.load %arg13[%c0_1, %c0_2] : memref<1x256xf32, #tpu.memory_space<vmem>>, vector<1x256xf32>
    %8 = vector.broadcast %6 : vector<128x1xf32> to vector<128x256xf32>
    %9 = vector.broadcast %7 : vector<1x256xf32> to vector<128x256xf32>
    %10 = arith.mulf %8, %9 : vector<128x256xf32>
    %c0_3 = arith.constant 0 : index
    %c0_4 = arith.constant 0 : index
    %c0_5 = arith.constant 0 : index
    %11 = vector.load %arg12[%c0_3, %c0_4, %c0_5] : memref<1x128x256xf32, #tpu.memory_space<vmem>>, vector<1x128x256xf32>
    %12 = vector.shape_cast %11 : vector<1x128x256xf32> to vector<128x256xf32>
    %13 = vector.shape_cast %10 : vector<128x256xf32> to vector<1x128x256xf32>
    tpu.vector_store %arg12[%c0_3, %c0_4, %c0_5], %13 {strides = array<i32>} : memref<1x128x256xf32, #tpu.memory_space<vmem>>, vector<1x128x256xf32>,
    return
  }
  func.func @transform_0(%arg0: i32, %arg1: i32) -> (i32, i32, i32) {
    %c0_i32 = arith.constant 0 : i32
    %c0_i32_0 = arith.constant 0 : i32
    %c0_i32_1 = arith.constant 0 : i32
    return %arg0, %c0_i32, %c0_i32_0 : i32, i32, i32
  }
  func.func @transform_1(%arg0: i32, %arg1: i32) -> (i32, i32) {
    %c0_i32 = arith.constant 0 : i32
    %c0_i32_0 = arith.constant 0 : i32
    %c0_i32_1 = arith.constant 0 : i32
    return %c0_i32, %c0_i32_0 : i32, i32
  }
  func.func @transform_2(%arg0: i32, %arg1: i32) -> (i32, i32) {
    %c0_i32 = arith.constant 0 : i32
    %c0_i32_0 = arith.constant 0 : i32
    %c0_i32_1 = arith.constant 0 : i32
    return %c0_i32, %c0_i32_0 : i32, i32
  }
  func.func @transform_3(%arg0: i32, %arg1: i32) -> (i32, i32) {
    %c0_i32 = arith.constant 0 : i32
    %c0_i32_0 = arith.constant 0 : i32
    %c0_i32_1 = arith.constant 0 : i32
    return %c0_i32, %c0_i32_0 : i32, i32
  }
  func.func @transform_4(%arg0: i32, %arg1: i32) -> (i32, i32) {
    %c0_i32 = arith.constant 0 : i32
    %c0_i32_0 = arith.constant 0 : i32
    %c0_i32_1 = arith.constant 0 : i32
    return %c0_i32, %c0_i32_0 : i32, i32
  }
  func.func @transform_5(%arg0: i32, %arg1: i32) -> (i32, i32) {
    %c0_i32 = arith.constant 0 : i32
    %c0_i32_0 = arith.constant 0 : i32
    %c0_i32_1 = arith.constant 0 : i32
    return %c0_i32, %c0_i32_0 : i32, i32
  }
  func.func @transform_6(%arg0: i32, %arg1: i32) -> (i32, i32) {
    %c0_i32 = arith.constant 0 : i32
    %c0_i32_0 = arith.constant 0 : i32
    %c0_i32_1 = arith.constant 0 : i32
    return %c0_i32, %c0_i32_0 : i32, i32
  }
  func.func @transform_7(%arg0: i32, %arg1: i32) -> (i32, i32) {
    %c0_i32 = arith.constant 0 : i32
    %c0_i32_0 = arith.constant 0 : i32
    %c0_i32_1 = arith.constant 0 : i32
    return %c0_i32, %c0_i32_0 : i32, i32
  }
  func.func @transform_8(%arg0: i32, %arg1: i32) -> (i32, i32) {
    %c0_i32 = arith.constant 0 : i32
    %c0_i32_0 = arith.constant 0 : i32
    %c0_i32_1 = arith.constant 0 : i32
    return %c0_i32, %c0_i32_0 : i32, i32
  }
  func.func @transform_9(%arg0: i32, %arg1: i32) -> (i32, i32, i32) {
    %c0_i32 = arith.constant 0 : i32
    %c0_i32_0 = arith.constant 0 : i32
    %c0_i32_1 = arith.constant 0 : i32
    return %arg0, %c0_i32, %c0_i32_0 : i32, i32, i32
  }
  func.func @transform_10(%arg0: i32, %arg1: i32) -> (i32, i32, i32) {
    %c0_i32 = arith.constant 0 : i32
    %c0_i32_0 = arith.constant 0 : i32
    return %arg0, %arg1, %c0_i32 : i32, i32, i32
  }
}

</mosaic_0001>

<llo_original>
// kernel: _context_block_2d.1
$region0: #{_context_block_2d.1}
  #allocation0 [shape = 'u32[]', space=smem, size = 0x4, offset = 0x4, fixed_abs, tag = 'smem constant byte address 0x4 - core index']
  #allocation1 [shape = 'u32[144,128]{1,0:T(1,128)}', space=vmem, size = 0x12000, scoped, tag = 'internal scratch']
  #allocation2 [shape = 'f32[1,256]{1,0:T(1,128)}', space=vmem, size = 0x400, scoped, tag = 'scratch operand']
  #allocation3 [shape = 'f32[256,1]{1,0:T(8,128)}', space=vmem, size = 0x20000, scoped, tag = 'scratch operand']
  #allocation4 [shape = 'f32[1,1]{1,0:T(1,128)S(6)}', space=smem, size = 0x200, scoped, tag = 'scoped memory for _context_block_2d.1']
  %s0 = inlined_call_operand.vmem [shape: f32[2,4,256], index: 0, kind: input, shape index: {}, may-alias: {0,9}]
  %s1 = inlined_call_operand.vmem [shape: f32[1,4], index: 1, kind: input, shape index: {}]
  %s2 = inlined_call_operand.<no memory space> [shape: f32[1,1], index: 2, kind: input, shape index: {}]
  %s3 = inlined_call_operand.vmem [shape: f32[8,4], index: 3, kind: input, shape index: {}]
  %s4 = inlined_call_operand.vmem [shape: f32[8,1], index: 4, kind: input, shape index: {}]
  %s5 = inlined_call_operand.vmem [shape: f32[8,1], index: 5, kind: input, shape index: {}]
  %s6 = inlined_call_operand.vmem [shape: f32[8,1], index: 6, kind: input, shape index: {}]
  %s7 = inlined_call_operand.vmem [shape: f32[4,8], index: 7, kind: input, shape index: {}]
  %s8 = inlined_call_operand.vmem [shape: f32[4,1], index: 8, kind: input, shape index: {}]
  %s9 = inlined_call_operand.vmem [shape: f32[2,4,256], index: 9, kind: output, shape index: {0}, may-alias: {0,9}]
  %s10 = inlined_call_operand.hbm [shape: f32[2,256,256], index: 10, kind: output, shape index: {1}]
  %11 = xla_tuple %s9, %s10
  %s12 = sld [smem:[#allocation0]]
  $region81: #{_context_block_2d.1} parent=0
    _
  %s14 = ssub.s32 1, %s12
  %s15 = scalar_select 0, %s14, %s12
  %16 = sst [smem:[#allocation4]] %s2
  $region1: #{_context_block_2d.1} parent=0
    #allocation5 [shape = 'u8[262144]{0}', space=vmem, size = 0x40000, scoped, tag = 'output window, operand 1']
    #allocation6 [shape = 's32[2]{0}', space=sflag, size = 0x8, scoped, tag = 'scoped memory for _context_block_2d.1']
    %17 = vsyncpa [#allocation6], 0
    %s18 = scalar_lea.sflag [#allocation6], 1
    %19 = vsyncpa %s18, 0
    loop: start=0, step=1, limit=6
    $region2: #{_context_block_2d.1} parent=1 // loop_pre_header
      _
    $region3: #{_context_block_2d.1} parent=1 // loop_header
      %s21 = sphi 0, %s25
      %p22 = scmp.ge.s32.totalorder %s21, 6
      %s28 = sphi 0, %s40
      %s29 = sphi 0, %s36
      %s30 = sphi 0, %s28
      %s31 = sphi 0, %s29
      %s32 = sphi 0, %s30
      %s33 = sphi 0, %s31
      %s43 = sphi 0, %s45
      %s46 = sphi 0, %s43
      %s47 = sphi 0, %s46
      %s63 = sphi 0, %s47
      %s67 = sphi 0, %s67
      %s69 = sphi 0, %s67
      %s70 = sphi 0, %s69
      %s84 = sphi 0, %s70
      %s88 = sphi 0, %s88
      %s90 = sphi 0, %s88
      %s91 = sphi 0, %s90
      %s105 = sphi 0, %s91
      %s109 = sphi 0, %s109
      %s111 = sphi 0, %s109
      %s112 = sphi 0, %s111
      %s126 = sphi 0, %s112
      %s130 = sphi 0, %s130
      %s132 = sphi 0, %s130
      %s133 = sphi 0, %s132
      %s147 = sphi 0, %s133
      %s151 = sphi 0, %s151
      %s153 = sphi 0, %s151
      %s154 = sphi 0, %s153
      %s168 = sphi 0, %s154
      %s172 = sphi 0, %s172
      %s174 = sphi 0, %s172
      %s175 = sphi 0, %s174
      %s189 = sphi 0, %s175
      %s193 = sphi 0, %s193
      %s195 = sphi 0, %s193
      %s196 = sphi 0, %s195
      %s210 = sphi 0, %s196
      %s214 = sphi 0, %s214
      %s216 = sphi 0, %s214
      %s217 = sphi 0, %s216
      %s231 = sphi 0, %s217
      %s237 = sphi 0, %s239
      %s240 = sphi 0, %s237
      %s241 = sphi 0, %s240
      %s257 = sphi 0, %s241
      %s265 = sphi 0, %s267
      %s268 = sphi 0, %s265
      %s269 = sphi 0, %s268
      %s285 = sphi 0, %s269
    $region4: #{_context_block_2d.1} parent=1 // loop_header_branch
      %24 = sbr.rel (%p22) target = $region8
    $region5: #{_context_block_2d.1} parent=1 // loop_body
      %s26 = ssub.s32 %s21, 1
      %s27 = ssub.s32 %s21, 2
      %s34 = sadd.s32 1, %s29
      %p35 = scmp.ge.s32.totalorder %s34, 2
      %s36 = scalar_select %p35, 0, %s34
      %s37 = sadd.s32 1, %s28
      %s38 = scalar_select %p35, %s37, %s28
      %p39 = scmp.ge.s32.totalorder %s38, 2
      %s40 = scalar_select %p39, 0, %s38
      %s41 = ssub.s32 %s28, %s40
      %p42 = scmp.eq.s32.totalorder %s41, 0
      %s44 = sadd.s32 %s43, 1
      %s45 = scalar_select %p42, %s43, %s44
      %p48 = pneg %p42
      %p49 = scmp.eq.s32.totalorder %s21, 3
      %p50 = por %p48, %p49
      %p51 = scmp.ne.s32.totalorder %s43, %s46
      %p52 = scmp.eq.s32.totalorder %s21, 0
      %p53 = por %p51, %p52
      %p54 = scmp.ne.s32.totalorder %s43, %s46
      %p55 = scmp.eq.s32.totalorder %s26, 3
      %p56 = por %p54, %p55
      %p57 = scmp.ne.s32.totalorder %s46, %s47
      %p58 = scmp.eq.s32.totalorder %s26, 0
      %p59 = por %p57, %p58
      %p60 = scmp.ne.s32.totalorder %s46, %s47
      %p61 = scmp.eq.s32.totalorder %s27, 3
      %p62 = por %p60, %p61
      %p64 = scmp.ne.s32.totalorder %s47, %s63
      %p65 = scmp.eq.s32.totalorder %s27, 0
      %p66 = por %p64, %p65
      %s68 = sadd.s32 %s67, 1
      %p71 = scmp.eq.s32.totalorder %s21, 3
      %p72 = scmp.ne.s32.totalorder %s67, %s69
      %p73 = scmp.eq.s32.totalorder %s21, 0
      %p74 = por %p72, %p73
      %p75 = scmp.ne.s32.totalorder %s67, %s69
      %p76 = scmp.eq.s32.totalorder %s26, 3
      %p77 = por %p75, %p76
      %p78 = scmp.ne.s32.totalorder %s69, %s70
      %p79 = scmp.eq.s32.totalorder %s26, 0
      %p80 = por %p78, %p79
      %p81 = scmp.ne.s32.totalorder %s69, %s70
      %p82 = scmp.eq.s32.totalorder %s27, 3
      %p83 = por %p81, %p82
      %p85 = scmp.ne.s32.totalorder %s70, %s84
      %p86 = scmp.eq.s32.totalorder %s27, 0
      %p87 = por %p85, %p86
      %s89 = sadd.s32 %s88, 1
      %p92 = scmp.eq.s32.totalorder %s21, 3
      %p93 = scmp.ne.s32.totalorder %s88, %s90
      %p94 = scmp.eq.s32.totalorder %s21, 0
      %p95 = por %p93, %p94
      %p96 = scmp.ne.s32.totalorder %s88, %s90
      %p97 = scmp.eq.s32.totalorder %s26, 3
      %p98 = por %p96, %p97
      %p99 = scmp.ne.s32.totalorder %s90, %s91
      %p100 = scmp.eq.s32.totalorder %s26, 0
      %p101 = por %p99, %p100
      %p102 = scmp.ne.s32.totalorder %s90, %s91
      %p103 = scmp.eq.s32.totalorder %s27, 3
      %p104 = por %p102, %p103
      %p106 = scmp.ne.s32.totalorder %s91, %s105
      %p107 = scmp.eq.s32.totalorder %s27, 0
      %p108 = por %p106, %p107
      %s110 = sadd.s32 %s109, 1
      %p113 = scmp.eq.s32.totalorder %s21, 3
      %p114 = scmp.ne.s32.totalorder %s109, %s111
      %p115 = scmp.eq.s32.totalorder %s21, 0
      %p116 = por %p114, %p115
      %p117 = scmp.ne.s32.totalorder %s109, %s111
      %p118 = scmp.eq.s32.totalorder %s26, 3
      %p119 = por %p117, %p118
      %p120 = scmp.ne.s32.totalorder %s111, %s112
      %p121 = scmp.eq.s32.totalorder %s26, 0
      %p122 = por %p120, %p121
      %p123 = scmp.ne.s32.totalorder %s111, %s112
      %p124 = scmp.eq.s32.totalorder %s27, 3
      %p125 = por %p123, %p124
      %p127 = scmp.ne.s32.totalorder %s112, %s126
      %p128 = scmp.eq.s32.totalorder %s27, 0
      %p129 = por %p127, %p128
      %s131 = sadd.s32 %s130, 1
      %p134 = scmp.eq.s32.totalorder %s21, 3
      %p135 = scmp.ne.s32.totalorder %s130, %s132
      %p136 = scmp.eq.s32.totalorder %s21, 0
      %p137 = por %p135, %p136
      %p138 = scmp.ne.s32.totalorder %s130, %s132
      %p139 = scmp.eq.s32.totalorder %s26, 3
      %p140 = por %p138, %p139
      %p141 = scmp.ne.s32.totalorder %s132, %s133
      %p142 = scmp.eq.s32.totalorder %s26, 0
      %p143 = por %p141, %p142
      %p144 = scmp.ne.s32.totalorder %s132, %s133
      %p145 = scmp.eq.s32.totalorder %s27, 3
      %p146 = por %p144, %p145
      %p148 = scmp.ne.s32.totalorder %s133, %s147
      %p149 = scmp.eq.s32.totalorder %s27, 0
      %p150 = por %p148, %p149
      %s152 = sadd.s32 %s151, 1
      %p155 = scmp.eq.s32.totalorder %s21, 3
      %p156 = scmp.ne.s32.totalorder %s151, %s153
      %p157 = scmp.eq.s32.totalorder %s21, 0
      %p158 = por %p156, %p157
      %p159 = scmp.ne.s32.totalorder %s151, %s153
      %p160 = scmp.eq.s32.totalorder %s26, 3
      %p161 = por %p159, %p160
      %p162 = scmp.ne.s32.totalorder %s153, %s154
      %p163 = scmp.eq.s32.totalorder %s26, 0
      %p164 = por %p162, %p163
      %p165 = scmp.ne.s32.totalorder %s153, %s154
      %p166 = scmp.eq.s32.totalorder %s27, 3
      %p167 = por %p165, %p166
      %p169 = scmp.ne.s32.totalorder %s154, %s168
      %p170 = scmp.eq.s32.totalorder %s27, 0
      %p171 = por %p169, %p170
      %s173 = sadd.s32 %s172, 1
      %p176 = scmp.eq.s32.totalorder %s21, 3
      %p177 = scmp.ne.s32.totalorder %s172, %s174
      %p178 = scmp.eq.s32.totalorder %s21, 0
      %p179 = por %p177, %p178
      %p180 = scmp.ne.s32.totalorder %s172, %s174
      %p181 = scmp.eq.s32.totalorder %s26, 3
      %p182 = por %p180, %p181
      %p183 = scmp.ne.s32.totalorder %s174, %s175
      %p184 = scmp.eq.s32.totalorder %s26, 0
      %p185 = por %p183, %p184
      %p186 = scmp.ne.s32.totalorder %s174, %s175
      %p187 = scmp.eq.s32.totalorder %s27, 3
      %p188 = por %p186, %p187
      %p190 = scmp.ne.s32.totalorder %s175, %s189
      %p191 = scmp.eq.s32.totalorder %s27, 0
      %p192 = por %p190, %p191
      %s194 = sadd.s32 %s193, 1
      %p197 = scmp.eq.s32.totalorder %s21, 3
      %p198 = scmp.ne.s32.totalorder %s193, %s195
      %p199 = scmp.eq.s32.totalorder %s21, 0
      %p200 = por %p198, %p199
      %p201 = scmp.ne.s32.totalorder %s193, %s195
      %p202 = scmp.eq.s32.totalorder %s26, 3
      %p203 = por %p201, %p202
      %p204 = scmp.ne.s32.totalorder %s195, %s196
      %p205 = scmp.eq.s32.totalorder %s26, 0
      %p206 = por %p204, %p205
      %p207 = scmp.ne.s32.totalorder %s195, %s196
      %p208 = scmp.eq.s32.totalorder %s27, 3
      %p209 = por %p207, %p208
      %p211 = scmp.ne.s32.totalorder %s196, %s210
      %p212 = scmp.eq.s32.totalorder %s27, 0
      %p213 = por %p211, %p212
      %s215 = sadd.s32 %s214, 1
      %p218 = scmp.eq.s32.totalorder %s21, 3
      %p219 = scmp.ne.s32.totalorder %s214, %s216
      %p220 = scmp.eq.s32.totalorder %s21, 0
      %p221 = por %p219, %p220
      %p222 = scmp.ne.s32.totalorder %s214, %s216
      %p223 = scmp.eq.s32.totalorder %s26, 3
      %p224 = por %p222, %p223
      %p225 = scmp.ne.s32.totalorder %s216, %s217
      %p226 = scmp.eq.s32.totalorder %s26, 0
      %p227 = por %p225, %p226
      %p228 = scmp.ne.s32.totalorder %s216, %s217
      %p229 = scmp.eq.s32.totalorder %s27, 3
      %p230 = por %p228, %p229
      %p232 = scmp.ne.s32.totalorder %s217, %s231
      %p233 = scmp.eq.s32.totalorder %s27, 0
      %p234 = por %p232, %p233
      %s235 = ssub.s32 %s28, %s40
      %p236 = scmp.eq.s32.totalorder %s235, 0
      %s238 = sadd.s32 %s237, 1
      %s239 = scalar_select %p236, %s237, %s238
      %p242 = pneg %p236
      %p243 = scmp.eq.s32.totalorder %s21, 3
      %p244 = por %p242, %p243
      %p245 = scmp.ne.s32.totalorder %s237, %s240
      %p246 = scmp.eq.s32.totalorder %s21, 0
      %p247 = por %p245, %p246
      %p248 = scmp.ne.s32.totalorder %s237, %s240
      %p249 = scmp.eq.s32.totalorder %s26, 3
      %p250 = por %p248, %p249
      %p251 = scmp.ne.s32.totalorder %s240, %s241
      %p252 = scmp.eq.s32.totalorder %s26, 0
      %p253 = por %p251, %p252
      %p254 = scmp.ne.s32.totalorder %s240, %s241
      %p255 = scmp.eq.s32.totalorder %s27, 3
      %p256 = por %p254, %p255
      %p258 = scmp.ne.s32.totalorder %s241, %s257
      %p259 = scmp.eq.s32.totalorder %s27, 0
      %p260 = por %p258, %p259
      %s261 = ssub.s32 %s28, %s40
      %s262 = ssub.s32 %s29, %s36
      %s263 = sor.u32 %s261, %s262
      %p264 = scmp.eq.s32.totalorder %s263, 0
      %s266 = sadd.s32 %s265, 1
      %s267 = scalar_select %p264, %s265, %s266
      %p270 = pneg %p264
      %p271 = scmp.eq.s32.totalorder %s21, 3
      %p272 = por %p270, %p271
      %p273 = scmp.ne.s32.totalorder %s265, %s268
      %p274 = scmp.eq.s32.totalorder %s21, 0
      %p275 = por %p273, %p274
      %p276 = scmp.ne.s32.totalorder %s265, %s268
      %p277 = scmp.eq.s32.totalorder %s26, 3
      %p278 = por %p276, %p277
      %p279 = scmp.ne.s32.totalorder %s268, %s269
      %p280 = scmp.eq.s32.totalorder %s26, 0
      %p281 = por %p279, %p280
      %p282 = scmp.ne.s32.totalorder %s268, %s269
      %p283 = scmp.eq.s32.totalorder %s27, 3
      %p284 = por %p282, %p283
      %p286 = scmp.ne.s32.totalorder %s269, %s285
      %p287 = scmp.eq.s32.totalorder %s27, 0
      %p288 = por %p286, %p287
      %p289 = scmp.le.s32.totalorder 1, %s21
      %p290 = scmp.lt.s32.totalorder %s21, 5
      %p291 = pnand %p289, %p290
      %p292 = pneg %p291
      // Predicated region
      $region9: #{_context_block_2d.1} parent=5 // pred_check
        _
      $region10: #{_context_block_2d.1} parent=5 // pred_check_branch
        %294 = sbr.rel (%p291) target = $region12
      $region11: #{_context_block_2d.1} parent=5 // pred_region
        %s295 = ssub.s32 %s21, 1
        // Predicated region
        $region13: #{_context_block_2d.1} parent=11 // pred_check
          %p296 = pneg %p80
        $region14: #{_context_block_2d.1} parent=11 // pred_check_branch
          %298 = sbr.rel (%p296) target = $region16
        $region15: #{_context_block_2d.1} parent=11 // pred_region
          _
        $region16: #{_context_block_2d.1} parent=11 // pred_fallthru
          _
        // Predicated region
        $region17: #{_context_block_2d.1} parent=11 // pred_check
          %p299 = pneg %p101
        $region18: #{_context_block_2d.1} parent=11 // pred_check_branch
          %301 = sbr.rel (%p299) target = $region20
        $region19: #{_context_block_2d.1} parent=11 // pred_region
          _
        $region20: #{_context_block_2d.1} parent=11 // pred_fallthru
          _
        // Predicated region
        $region21: #{_context_block_2d.1} parent=11 // pred_check
          %p302 = pneg %p122
        $region22: #{_context_block_2d.1} parent=11 // pred_check_branch
          %304 = sbr.rel (%p302) target = $region24
        $region23: #{_context_block_2d.1} parent=11 // pred_region
          _
        $region24: #{_context_block_2d.1} parent=11 // pred_fallthru
          _
        // Predicated region
        $region25: #{_context_block_2d.1} parent=11 // pred_check
          %p305 = pneg %p143
        $region26: #{_context_block_2d.1} parent=11 // pred_check_branch
          %307 = sbr.rel (%p305) target = $region28
        $region27: #{_context_block_2d.1} parent=11 // pred_region
          _
        $region28: #{_context_block_2d.1} parent=11 // pred_fallthru
          _
        // Predicated region
        $region29: #{_context_block_2d.1} parent=11 // pred_check
          %p308 = pneg %p164
        $region30: #{_context_block_2d.1} parent=11 // pred_check_branch
          %310 = sbr.rel (%p308) target = $region32
        $region31: #{_context_block_2d.1} parent=11 // pred_region
          _
        $region32: #{_context_block_2d.1} parent=11 // pred_fallthru
          _
        // Predicated region
        $region33: #{_context_block_2d.1} parent=11 // pred_check
          %p311 = pneg %p185
        $region34: #{_context_block_2d.1} parent=11 // pred_check_branch
          %313 = sbr.rel (%p311) target = $region36
        $region35: #{_context_block_2d.1} parent=11 // pred_region
          _
        $region36: #{_context_block_2d.1} parent=11 // pred_fallthru
          _
        // Predicated region
        $region37: #{_context_block_2d.1} parent=11 // pred_check
          %p314 = pneg %p206
        $region38: #{_context_block_2d.1} parent=11 // pred_check_branch
          %316 = sbr.rel (%p314) target = $region40
        $region39: #{_context_block_2d.1} parent=11 // pred_region
          _
        $region40: #{_context_block_2d.1} parent=11 // pred_fallthru
          _
        // Predicated region
        $region41: #{_context_block_2d.1} parent=11 // pred_check
          %p317 = pneg %p227
        $region42: #{_context_block_2d.1} parent=11 // pred_check_branch
          %319 = sbr.rel (%p317) target = $region44
        $region43: #{_context_block_2d.1} parent=11 // pred_region
          _
        $region44: #{_context_block_2d.1} parent=11 // pred_fallthru
          _
      $region12: #{_context_block_2d.1} parent=5 // pred_fallthru
        _
      %p320 = scmp.lt.s32.totalorder %s21, 4
      // Predicated region
      $region45: #{_context_block_2d.1} parent=5 // pred_check
        %p321 = pneg %p320
      $region46: #{_context_block_2d.1} parent=5 // pred_check_branch
        %323 = sbr.rel (%p321) target = $region48
      $region47: #{_context_block_2d.1} parent=5 // pred_region
        // Predicated region
        $region49: #{_context_block_2d.1} parent=47 // pred_check
          %p324 = pneg %p53
        $region50: #{_context_block_2d.1} parent=47 // pred_check_branch
          %326 = sbr.rel (%p324) target = $region52
        $region51: #{_context_block_2d.1} parent=47 // pred_region
          %p327 = scmp.lt.s32.totalorder %s28, 1
          %s328 = scalar_select %p327, %s28, 1
          %s329 = smul.addr %s328, 2
          %s330 = smul.addr %s329, 4
          %s331 = scalar_lea.vmem %s0, %s330
        $region52: #{_context_block_2d.1} parent=47 // pred_fallthru
          _
      $region48: #{_context_block_2d.1} parent=5 // pred_fallthru
        _
      %p332 = scmp.le.s32.totalorder 1, %s21
      %p333 = scmp.lt.s32.totalorder %s21, 5
      %p334 = pnand %p332, %p333
      %p335 = pneg %p334
      // Predicated region
      $region53: #{_context_block_2d.1} parent=5 // pred_check
        _
      $region54: #{_context_block_2d.1} parent=5 // pred_check_branch
        %337 = sbr.rel (%p334) target = $region56
      $region55: #{_context_block_2d.1} parent=5 // pred_region
        %s338 = ssub.s32 %s21, 1
        %p339 = scmp.lt.s32.totalorder %s30, 1
        %s340 = scalar_select %p339, %s30, 1
        %s341 = smul.addr %s340, 2
        %s342 = smul.addr %s341, 4
        %s343 = scalar_lea.vmem %s0, %s342
        %p344 = pneg %p59
        %p345 = pneg %p56
        %p346 = pneg %p80
        %p347 = pneg %p77
        %p348 = pneg %p101
        %p349 = pneg %p98
        %p350 = pneg %p122
        %p351 = pneg %p119
        %p352 = pneg %p143
        %p353 = pneg %p140
        %p354 = pneg %p164
        %p355 = pneg %p161
        %p356 = pneg %p185
        %p357 = pneg %p182
        %p358 = pneg %p206
        %p359 = pneg %p203
        %p360 = pneg %p227
        %p361 = pneg %p224
        %p362 = pneg %p253
        %p363 = pneg %p250
        %p364 = scmp.lt.s32.totalorder %s30, 1
        %s365 = scalar_select %p364, %s30, 1
        %s366 = smul.addr %s365, 2
        %s367 = smul.addr %s366, 4
        %s368 = scalar_lea.vmem %s9, %s367
        %p369 = pneg %p281
        %p370 = pneg %p278
        %s371 = sand.u32 %s268, 1
        %s372 = scalar_lea.sflag [#allocation6], %s371
        %s373 = sand.u32 %s268, 1
        %s374 = smul.addr %s373, 256
        %s375 = scalar_lea.vmem [#allocation5], %s374
        %p376 = scmp.lt.s32.totalorder %s30, 1
        %s377 = scalar_select %p376, %s30, 1
        %s378 = smul.addr %s377, 2
        %s379 = smul.addr %s378, 4
        %s380 = scalar_lea.vmem %s0, %s379
        %p381 = scmp.lt.s32.totalorder %s30, 1
        %s382 = scalar_select %p381, %s30, 1
        %s383 = smul.addr %s382, 2
        %s384 = smul.addr %s383, 4
        %s385 = scalar_lea.vmem %s9, %s384
        %s386 = smul.u32 16, %s31
        %p387 = scmp.eq.s32.totalorder %s31, 0
        // Predicated region
        $region57: #{_context_block_2d.1} parent=55 // pred_check
          %p388 = pneg %p387
        $region58: #{_context_block_2d.1} parent=55 // pred_check_branch
          %390 = sbr.rel (%p388) target = $region60
        $region59: #{_context_block_2d.1} parent=55 // pred_region
          %v391 = vld [vmem:[%s380] sm:$0xff]
          %v392 = vld [vmem:[%s1] sm:$0x1]
          %s393 = sld [smem:[#allocation4]]
          %v394 = vstv %s393
          %v396 = vcombine.high %v391, %v391
          %vm397 = vcmask 31744
          %v399 = vsel %vm397, %v392, 0
          %vm401 = vcmask 1043456
          %v402 = vsel %vm401, %v391, 0
          %v404 = vsel %vm401, %v396, 0
          %406 = vmatprep.subr.mxu0 %v404
          %407 = vmatpush1.msra.mxu0 %v402
          %408 = vmatprep.subr.mxu0 0.0
          %409 = vmatpush1.msra.mxu0 0.0
          %410 = vmatprep.subr.mxu0 0.0
          %411 = vmatpush1.msra.mxu0 0.0
          %412 = vmatprep.subr.mxu0 0.0
          %413 = vmatpush1.msra.mxu0 0.0
          %414 = vmatprep.subr.mxu0 0.0
          %415 = vmatpush1.msra.mxu0 0.0
          %416 = vmatprep.subr.mxu0 0.0
          %417 = vmatpush1.msra.mxu0 0.0
          %418 = vmatprep.subr.mxu0 0.0
          %419 = vmatpush1.msra.mxu0 0.0
          %420 = vmatprep.subr.mxu0 0.0
          %421 = vmatpush1.msra.mxu0 0.0
          %422 = vmatprep.subr.mxu0 0.0
          %423 = vmatpush1.msra.mxu0 0.0
          %424 = vmatprep.subr.mxu0 0.0
          %425 = vmatpush1.msra.mxu0 0.0
          %426 = vmatprep.subr.mxu0 0.0
          %427 = vmatpush1.msra.mxu0 0.0
          %428 = vmatprep.subr.mxu0 0.0
          %429 = vmatpush1.msra.mxu0 0.0
          %430 = vmatprep.subr.mxu0 0.0
          %431 = vmatpush1.msra.mxu0 0.0
          %432 = vmatprep.subr.mxu0 0.0
          %433 = vmatpush1.msra.mxu0 0.0
          %434 = vmatprep.subr.mxu0 0.0
          %435 = vmatpush1.msra.mxu0 0.0
          %436 = vmatprep.subr.mxu0 0.0
          %437 = vmatpush1.msra.mxu0 0.0
          %438 = vmatprep.subr.mxu0 0.0
          %439 = vmatpush1.msra.mxu0 0.0
          %440 = vmatprep.subr.mxu0 0.0
          %441 = vmatpush1.msra.mxu0 0.0
          %442 = vmatprep.subr.mxu0 0.0
          %443 = vmatpush1.msra.mxu0 0.0
          %444 = vmatprep.subr.mxu0 0.0
          %445 = vmatpush1.msra.mxu0 0.0
          %446 = vmatprep.subr.mxu0 0.0
          %447 = vmatpush1.msra.mxu0 0.0
          %448 = vmatprep.subr.mxu0 0.0
          %449 = vmatpush1.msra.mxu0 0.0
          %450 = vmatprep.subr.mxu0 0.0
          %451 = vmatpush1.msra.mxu0 0.0
          %452 = vmatprep.subr.mxu0 0.0
          %453 = vmatpush1.msra.mxu0 0.0
          %454 = vmatprep.subr.mxu0 0.0
          %455 = vmatpush1.msra.mxu0 0.0
          %456 = vmatprep.subr.mxu0 0.0
          %457 = vmatpush1.msra.mxu0 0.0
          %458 = vmatprep.subr.mxu0 0.0
          %459 = vmatpush1.msra.mxu0 0.0
          %460 = vmatprep.subr.mxu0 0.0
          %461 = vmatpush1.msra.mxu0 0.0
          %462 = vmatprep.subr.mxu0 0.0
          %463 = vmatpush1.msra.mxu0 0.0
          %464 = vmatprep.subr.mxu0 0.0
          %465 = vmatpush1.msra.mxu0 0.0
          %466 = vmatprep.subr.mxu0 0.0
          %467 = vmatpush1.msra.mxu0 0.0
          %468 = vmatprep.subr.mxu0 0.0
          %469 = vmatpush1.msra.mxu0 0.0
          %470 = vmatprep.mubr.f32.mxu0 0.0
          %471 = vmatmul.mubr.f32.gmra.mrb[0].mxu0 %v399
          %v472 = vpop.f32.mrb[0].mxu0
          %v473 = vadd.f32 %v394, %v472
          %v474 = vpop.f32.mrb[0].mxu0
          %v475 = vadd.f32 %v394, %v474
          %476 = vdwg.mxu0
          %vm477 = vcmask 1040384
          %v478 = vsel %vm477, %v473, -inf
          %v479 = vsel %vm477, %v475, -inf
          %v480 = vmax.f32 %v478, %v479
          %481 = vmax.xlane.f32.xlu0 %v480
          %v482 = vpop.xlane.xlu0 %481
          %v483 = vsub.f32 %v473, %v482
          %v484 = vsub.f32 %v475, %v482
          %v485 = vmul.f32 %v483, 1.442695
          %v486 = vpow.pop %v485
          %v487 = vmul.f32 %v484, 1.442695
          %v488 = vpow.pop %v487
          %v489 = vsel %vm477, %v486, 0.0
          %v490 = vsel %vm477, %v488, 0.0
          %v491 = vadd.f32 %v489, %v490
          %492 = vadd.xlane.f32.xlu0 %v491
          %v493 = vpop.xlane.xlu0 %492
          %v494 = vrcp.pop %v493
          %v495 = vmul.f32 %v486, %v494
          %v496 = vmul.f32 %v488, %v494
          %v499 = vcombine.low %v495, %v496
          %v501 = vunpack.c.l.s4 1966171168
          %v502 = vunpack.c.0.s8 %v501
          %v503 = vlaneseq
          %v504 = vshrl.u32 %v503, 7
          %v505 = vsub.s32 %v502, %v504
          %v506 = vrot.slane %v499, %v505
          %v508 = vunpack.c.l.s4 1966171168
          %v509 = vunpack.c.0.s8 %v508
          %v510 = vlaneseq
          %v511 = vshrl.u32 %v510, 7
          %v512 = vsub.s32 %v509, %v511
          %v513 = vrot.slane %v506, %v512
          %v515 = vlaneseq
          %vm516 = vcmp.ge.s32.totalorder %v515, 0
          %vm517 = vcmp.lt.s32.totalorder %v515, 256
          %vm518 = vmand %vm516, %vm517
          %519 = vst.msk [vmem:[#allocation2] sm:$0x3] %vm518, %v513
          %520 = vxpose.xlu0.b32.start [1/16] %v495, 128
          %521 = vxpose.xlu0.b32.cont [2/16] 0.0, 128
          %522 = vxpose.xlu0.b32.cont [3/16] 0.0, 128
          %523 = vxpose.xlu0.b32.cont [4/16] 0.0, 128
          %524 = vxpose.xlu0.b32.cont [5/16] 0.0, 128
          %525 = vxpose.xlu0.b32.cont [6/16] 0.0, 128
          %526 = vxpose.xlu0.b32.cont [7/16] 0.0, 128
          %527 = vxpose.xlu0.b32.cont [8/16] 0.0, 128
          %528 = vxpose.xlu0.b32.cont [9/16] 0.0, 128
          %529 = vxpose.xlu0.b32.cont [10/16] 0.0, 128
          %530 = vxpose.xlu0.b32.cont [11/16] 0.0, 128
          %531 = vxpose.xlu0.b32.cont [12/16] 0.0, 128
          %532 = vxpose.xlu0.b32.cont [13/16] 0.0, 128
          %533 = vxpose.xlu0.b32.cont [14/16] 0.0, 128
          %534 = vxpose.xlu0.b32.cont [15/16] 0.0, 128
          %535 = vxpose.xlu0.b32.end [16/16] 0.0, 128
          %v536 = vpop.trf.xlu0
          %v537 = vpop.trf.xlu0
          %v538 = vpop.trf.xlu0
          %v539 = vpop.trf.xlu0
          %v540 = vpop.trf.xlu0
          %v541 = vpop.trf.xlu0
          %v542 = vpop.trf.xlu0
          %v543 = vpop.trf.xlu0
          %v544 = vpop.trf.xlu0
          %v545 = vpop.trf.xlu0
          %v546 = vpop.trf.xlu0
          %v547 = vpop.trf.xlu0
          %v548 = vpop.trf.xlu0
          %v549 = vpop.trf.xlu0
          %v550 = vpop.trf.xlu0
          %v551 = vpop.trf.xlu0
          %552 = vxpose.xlu0.b32.start [1/16] %v496, 128
          %553 = vxpose.xlu0.b32.cont [2/16] 0.0, 128
          %554 = vxpose.xlu0.b32.cont [3/16] 0.0, 128
          %555 = vxpose.xlu0.b32.cont [4/16] 0.0, 128
          %556 = vxpose.xlu0.b32.cont [5/16] 0.0, 128
          %557 = vxpose.xlu0.b32.cont [6/16] 0.0, 128
          %558 = vxpose.xlu0.b32.cont [7/16] 0.0, 128
          %559 = vxpose.xlu0.b32.cont [8/16] 0.0, 128
          %560 = vxpose.xlu0.b32.cont [9/16] 0.0, 128
          %561 = vxpose.xlu0.b32.cont [10/16] 0.0, 128
          %562 = vxpose.xlu0.b32.cont [11/16] 0.0, 128
          %563 = vxpose.xlu0.b32.cont [12/16] 0.0, 128
          %564 = vxpose.xlu0.b32.cont [13/16] 0.0, 128
          %565 = vxpose.xlu0.b32.cont [14/16] 0.0, 128
          %566 = vxpose.xlu0.b32.cont [15/16] 0.0, 128
          %567 = vxpose.xlu0.b32.end [16/16] 0.0, 128
          %v568 = vpop.trf.xlu0
          %v569 = vpop.trf.xlu0
          %v570 = vpop.trf.xlu0
          %v571 = vpop.trf.xlu0
          %v572 = vpop.trf.xlu0
          %v573 = vpop.trf.xlu0
          %v574 = vpop.trf.xlu0
          %v575 = vpop.trf.xlu0
          %v576 = vpop.trf.xlu0
          %v577 = vpop.trf.xlu0
          %v578 = vpop.trf.xlu0
          %v579 = vpop.trf.xlu0
          %v580 = vpop.trf.xlu0
          %v581 = vpop.trf.xlu0
          %v582 = vpop.trf.xlu0
          %v583 = vpop.trf.xlu0
          %vm584 = vcmask 7168
          %v586 = vsel %vm584, %v536, 0
          %v589 = vsel %vm584, %v537, 0
          %v592 = vsel %vm584, %v538, 0
          %v595 = vsel %vm584, %v539, 0
          %v598 = vsel %vm584, %v540, 0
          %v601 = vsel %vm584, %v541, 0
          %v604 = vsel %vm584, %v542, 0
          %v607 = vsel %vm584, %v543, 0
          %v610 = vsel %vm584, %v544, 0
          %v613 = vsel %vm584, %v545, 0
          %v616 = vsel %vm584, %v546, 0
          %v619 = vsel %vm584, %v547, 0
          %v622 = vsel %vm584, %v548, 0
          %v625 = vsel %vm584, %v549, 0
          %v628 = vsel %vm584, %v550, 0
          %v631 = vsel %vm584, %v551, 0
          %v634 = vsel %vm584, %v568, 0
          %v637 = vsel %vm584, %v569, 0
          %v640 = vsel %vm584, %v570, 0
          %v643 = vsel %vm584, %v571, 0
          %v646 = vsel %vm584, %v572, 0
          %v649 = vsel %vm584, %v573, 0
          %v652 = vsel %vm584, %v574, 0
          %v655 = vsel %vm584, %v575, 0
          %v658 = vsel %vm584, %v576, 0
          %v661 = vsel %vm584, %v577, 0
          %v664 = vsel %vm584, %v578, 0
          %v667 = vsel %vm584, %v579, 0
          %v670 = vsel %vm584, %v580, 0
          %v673 = vsel %vm584, %v581, 0
          %v676 = vsel %vm584, %v582, 0
          %v679 = vsel %vm584, %v583, 0
          %v682 = vsel %vm477, 1.0, 0
          %684 = vmatprep.subr.mxu0 0.0
          %685 = vmatpush1.msra.mxu0 %v682
          %686 = vmatprep.subr.mxu0 0.0
          %687 = vmatpush1.msra.mxu0 0.0
          %688 = vmatprep.subr.mxu0 0.0
          %689 = vmatpush1.msra.mxu0 0.0
          %690 = vmatprep.subr.mxu0 0.0
          %691 = vmatpush1.msra.mxu0 0.0
          %692 = vmatprep.subr.mxu0 0.0
          %693 = vmatpush1.msra.mxu0 0.0
          %694 = vmatprep.subr.mxu0 0.0
          %695 = vmatpush1.msra.mxu0 0.0
          %696 = vmatprep.subr.mxu0 0.0
          %697 = vmatpush1.msra.mxu0 0.0
          %698 = vmatprep.subr.mxu0 0.0
          %699 = vmatpush1.msra.mxu0 0.0
          %700 = vmatprep.subr.mxu0 0.0
          %701 = vmatpush1.msra.mxu0 0.0
          %702 = vmatprep.subr.mxu0 0.0
          %703 = vmatpush1.msra.mxu0 0.0
          %704 = vmatprep.subr.mxu0 0.0
          %705 = vmatpush1.msra.mxu0 0.0
          %706 = vmatprep.subr.mxu0 0.0
          %707 = vmatpush1.msra.mxu0 0.0
          %708 = vmatprep.subr.mxu0 0.0
          %709 = vmatpush1.msra.mxu0 0.0
          %710 = vmatprep.subr.mxu0 0.0
          %711 = vmatpush1.msra.mxu0 0.0
          %712 = vmatprep.subr.mxu0 0.0
          %713 = vmatpush1.msra.mxu0 0.0
          %714 = vmatprep.subr.mxu0 0.0
          %715 = vmatpush1.msra.mxu0 0.0
          %716 = vmatprep.subr.mxu0 0.0
          %717 = vmatpush1.msra.mxu0 0.0
          %718 = vmatprep.subr.mxu0 0.0
          %719 = vmatpush1.msra.mxu0 0.0
          %720 = vmatprep.subr.mxu0 0.0
          %721 = vmatpush1.msra.mxu0 0.0
          %722 = vmatprep.subr.mxu0 0.0
          %723 = vmatpush1.msra.mxu0 0.0
          %724 = vmatprep.subr.mxu0 0.0
          %725 = vmatpush1.msra.mxu0 0.0
          %726 = vmatprep.subr.mxu0 0.0
          %727 = vmatpush1.msra.mxu0 0.0
          %728 = vmatprep.subr.mxu0 0.0
          %729 = vmatpush1.msra.mxu0 0.0
          %730 = vmatprep.subr.mxu0 0.0
          %731 = vmatpush1.msra.mxu0 0.0
          %732 = vmatprep.subr.mxu0 0.0
          %733 = vmatpush1.msra.mxu0 0.0
          %734 = vmatprep.subr.mxu0 0.0
          %735 = vmatpush1.msra.mxu0 0.0
          %736 = vmatprep.subr.mxu0 0.0
          %737 = vmatpush1.msra.mxu0 0.0
          %738 = vmatprep.subr.mxu0 0.0
          %739 = vmatpush1.msra.mxu0 0.0
          %740 = vmatprep.subr.mxu0 0.0
          %741 = vmatpush1.msra.mxu0 0.0
          %742 = vmatprep.subr.mxu0 0.0
          %743 = vmatpush1.msra.mxu0 0.0
          %744 = vmatprep.subr.mxu0 0.0
          %745 = vmatpush1.msra.mxu0 0.0
          %746 = vmatprep.subr.mxu0 0.0
          %747 = vmatpush1.msra.mxu0 0.0
          %748 = vmatprep.mubr.f32.mxu0 0.0
          %749 = vmatmul.mubr.f32.gmra.mrb[0].mxu0 %v586
          %v750 = vpop.f32.mrb[0].mxu0
          %v751 = vadd.f32 0.0, %v750
          %v752 = vpop.f32.mrb[0].mxu0
          %753 = vmatprep.mubr.f32.mxu0 0.0
          %754 = vmatmul.mubr.f32.gmra.mrb[0].mxu0 %v589
          %v755 = vpop.f32.mrb[0].mxu0
          %v756 = vadd.f32 0.0, %v755
          %v757 = vpop.f32.mrb[0].mxu0
          %758 = vmatprep.mubr.f32.mxu0 0.0
          %759 = vmatmul.mubr.f32.gmra.mrb[0].mxu0 %v592
          %v760 = vpop.f32.mrb[0].mxu0
          %v761 = vadd.f32 0.0, %v760
          %v762 = vpop.f32.mrb[0].mxu0
          %763 = vmatprep.mubr.f32.mxu0 0.0
          %764 = vmatmul.mubr.f32.gmra.mrb[0].mxu0 %v595
          %v765 = vpop.f32.mrb[0].mxu0
          %v766 = vadd.f32 0.0, %v765
          %v767 = vpop.f32.mrb[0].mxu0
          %768 = vmatprep.mubr.f32.mxu0 0.0
          %769 = vmatmul.mubr.f32.gmra.mrb[0].mxu0 %v598
          %v770 = vpop.f32.mrb[0].mxu0
          %v771 = vadd.f32 0.0, %v770
          %v772 = vpop.f32.mrb[0].mxu0
          %773 = vmatprep.mubr.f32.mxu0 0.0
          %774 = vmatmul.mubr.f32.gmra.mrb[0].mxu0 %v601
          %v775 = vpop.f32.mrb[0].mxu0
          %v776 = vadd.f32 0.0, %v775
          %v777 = vpop.f32.mrb[0].mxu0
          %778 = vmatprep.mubr.f32.mxu0 0.0
          %779 = vmatmul.mubr.f32.gmra.mrb[0].mxu0 %v604
          %v780 = vpop.f32.mrb[0].mxu0
          %v781 = vadd.f32 0.0, %v780
          %v782 = vpop.f32.mrb[0].mxu0
          %783 = vmatprep.mubr.f32.mxu0 0.0
          %784 = vmatmul.mubr.f32.gmra.mrb[0].mxu0 %v607
          %v785 = vpop.f32.mrb[0].mxu0
          %v786 = vadd.f32 0.0, %v785
          %v787 = vpop.f32.mrb[0].mxu0
          %788 = vmatprep.mubr.f32.mxu0 0.0
          %789 = vmatmul.mubr.f32.gmra.mrb[0].mxu0 %v610
          %v790 = vpop.f32.mrb[0].mxu0
          %v791 = vadd.f32 0.0, %v790
          %v792 = vpop.f32.mrb[0].mxu0
          %793 = vmatprep.mubr.f32.mxu0 0.0
          %794 = vmatmul.mubr.f32.gmra.mrb[0].mxu0 %v613
          %v795 = vpop.f32.mrb[0].mxu0
          %v796 = vadd.f32 0.0, %v795
          %v797 = vpop.f32.mrb[0].mxu0
          %798 = vmatprep.mubr.f32.mxu0 0.0
          %799 = vmatmul.mubr.f32.gmra.mrb[0].mxu0 %v616
          %v800 = vpop.f32.mrb[0].mxu0
          %v801 = vadd.f32 0.0, %v800
          %v802 = vpop.f32.mrb[0].mxu0
          %803 = vmatprep.mubr.f32.mxu0 0.0
          %804 = vmatmul.mubr.f32.gmra.mrb[0].mxu0 %v619
          %v805 = vpop.f32.mrb[0].mxu0
          %v806 = vadd.f32 0.0, %v805
          %v807 = vpop.f32.mrb[0].mxu0
          %808 = vmatprep.mubr.f32.mxu0 0.0
          %809 = vmatmul.mubr.f32.gmra.mrb[0].mxu0 %v622
          %v810 = vpop.f32.mrb[0].mxu0
          %v811 = vadd.f32 0.0, %v810
          %v812 = vpop.f32.mrb[0].mxu0
          %813 = vmatprep.mubr.f32.mxu0 0.0
          %814 = vmatmul.mubr.f32.gmra.mrb[0].mxu0 %v625
          %v815 = vpop.f32.mrb[0].mxu0
          %v816 = vadd.f32 0.0, %v815
          %v817 = vpop.f32.mrb[0].mxu0
          %818 = vmatprep.mubr.f32.mxu0 0.0
          %819 = vmatmul.mubr.f32.gmra.mrb[0].mxu0 %v628
          %v820 = vpop.f32.mrb[0].mxu0
          %v821 = vadd.f32 0.0, %v820
          %v822 = vpop.f32.mrb[0].mxu0
          %823 = vmatprep.mubr.f32.mxu0 0.0
          %824 = vmatmul.mubr.f32.gmra.mrb[0].mxu0 %v631
          %v825 = vpop.f32.mrb[0].mxu0
          %v826 = vadd.f32 0.0, %v825
          %v827 = vpop.f32.mrb[0].mxu0
          %828 = vmatprep.mubr.f32.mxu0 0.0
          %829 = vmatmul.mubr.f32.gmra.mrb[0].mxu0 %v634
          %v830 = vpop.f32.mrb[0].mxu0
          %v831 = vadd.f32 0.0, %v830
          %v832 = vpop.f32.mrb[0].mxu0
          %833 = vmatprep.mubr.f32.mxu0 0.0
          %834 = vmatmul.mubr.f32.gmra.mrb[0].mxu0 %v637
          %v835 = vpop.f32.mrb[0].mxu0
          %v836 = vadd.f32 0.0, %v835
          %v837 = vpop.f32.mrb[0].mxu0
          %838 = vmatprep.mubr.f32.mxu0 0.0
          %839 = vmatmul.mubr.f32.gmra.mrb[0].mxu0 %v640
          %v840 = vpop.f32.mrb[0].mxu0
          %v841 = vadd.f32 0.0, %v840
          %v842 = vpop.f32.mrb[0].mxu0
          %843 = vmatprep.mubr.f32.mxu0 0.0
          %844 = vmatmul.mubr.f32.gmra.mrb[0].mxu0 %v643
          %v845 = vpop.f32.mrb[0].mxu0
          %v846 = vadd.f32 0.0, %v845
          %v847 = vpop.f32.mrb[0].mxu0
          %848 = vmatprep.mubr.f32.mxu0 0.0
          %849 = vmatmul.mubr.f32.gmra.mrb[0].mxu0 %v646
          %v850 = vpop.f32.mrb[0].mxu0
          %v851 = vadd.f32 0.0, %v850
          %v852 = vpop.f32.mrb[0].mxu0
          %853 = vmatprep.mubr.f32.mxu0 0.0
          %854 = vmatmul.mubr.f32.gmra.mrb[0].mxu0 %v649
          %v855 = vpop.f32.mrb[0].mxu0
          %v856 = vadd.f32 0.0, %v855
          %v857 = vpop.f32.mrb[0].mxu0
          %858 = vmatprep.mubr.f32.mxu0 0.0
          %859 = vmatmul.mubr.f32.gmra.mrb[0].mxu0 %v652
          %v860 = vpop.f32.mrb[0].mxu0
          %v861 = vadd.f32 0.0, %v860
          %v862 = vpop.f32.mrb[0].mxu0
          %863 = vmatprep.mubr.f32.mxu0 0.0
          %864 = vmatmul.mubr.f32.gmra.mrb[0].mxu0 %v655
          %v865 = vpop.f32.mrb[0].mxu0
          %v866 = vadd.f32 0.0, %v865
          %v867 = vpop.f32.mrb[0].mxu0
          %868 = vmatprep.mubr.f32.mxu0 0.0
          %869 = vmatmul.mubr.f32.gmra.mrb[0].mxu0 %v658
          %v870 = vpop.f32.mrb[0].mxu0
          %v871 = vadd.f32 0.0, %v870
          %v872 = vpop.f32.mrb[0].mxu0
          %873 = vmatprep.mubr.f32.mxu0 0.0
          %874 = vmatmul.mubr.f32.gmra.mrb[0].mxu0 %v661
          %v875 = vpop.f32.mrb[0].mxu0
          %v876 = vadd.f32 0.0, %v875
          %v877 = vpop.f32.mrb[0].mxu0
          %878 = vmatprep.mubr.f32.mxu0 0.0
          %879 = vmatmul.mubr.f32.gmra.mrb[0].mxu0 %v664
          %v880 = vpop.f32.mrb[0].mxu0
          %v881 = vadd.f32 0.0, %v880
          %v882 = vpop.f32.mrb[0].mxu0
          %883 = vmatprep.mubr.f32.mxu0 0.0
          %884 = vmatmul.mubr.f32.gmra.mrb[0].mxu0 %v667
          %v885 = vpop.f32.mrb[0].mxu0
          %v886 = vadd.f32 0.0, %v885
          %v887 = vpop.f32.mrb[0].mxu0
          %888 = vmatprep.mubr.f32.mxu0 0.0
          %889 = vmatmul.mubr.f32.gmra.mrb[0].mxu0 %v670
          %v890 = vpop.f32.mrb[0].mxu0
          %v891 = vadd.f32 0.0, %v890
          %v892 = vpop.f32.mrb[0].mxu0
          %893 = vmatprep.mubr.f32.mxu0 0.0
          %894 = vmatmul.mubr.f32.gmra.mrb[0].mxu0 %v673
          %v895 = vpop.f32.mrb[0].mxu0
          %v896 = vadd.f32 0.0, %v895
          %v897 = vpop.f32.mrb[0].mxu0
          %898 = vmatprep.mubr.f32.mxu0 0.0
          %899 = vmatmul.mubr.f32.gmra.mrb[0].mxu0 %v676
          %v900 = vpop.f32.mrb[0].mxu0
          %v901 = vadd.f32 0.0, %v900
          %v902 = vpop.f32.mrb[0].mxu0
          %903 = vmatprep.mubr.f32.mxu0 0.0
          %904 = vmatmul.mubr.f32.gmra.mrb[0].mxu0 %v679
          %v905 = vpop.f32.mrb[0].mxu0
          %v906 = vadd.f32 0.0, %v905
          %v907 = vpop.f32.mrb[0].mxu0
          %908 = vdwg.mxu0
          %909 = vst.msk [vmem:[#allocation3] sm:$0xff] %vm584, %v751
          %910 = vst.msk [vmem:[#allocation3 + $0x8] sm:$0xff] %vm584, %v756
          %911 = vst.msk [vmem:[#allocation3 + $0x10] sm:$0xff] %vm584, %v761
          %912 = vst.msk [vmem:[#allocation3 + $0x18] sm:$0xff] %vm584, %v766
          %913 = vst.msk [vmem:[#allocation3 + $0x20] sm:$0xff] %vm584, %v771
          %914 = vst.msk [vmem:[#allocation3 + $0x28] sm:$0xff] %vm584, %v776
          %915 = vst.msk [vmem:[#allocation3 + $0x30] sm:$0xff] %vm584, %v781
          %916 = vst.msk [vmem:[#allocation3 + $0x38] sm:$0xff] %vm584, %v786
          %917 = vst.msk [vmem:[#allocation3 + $0x40] sm:$0xff] %vm584, %v791
          %918 = vst.msk [vmem:[#allocation3 + $0x48] sm:$0xff] %vm584, %v796
          %919 = vst.msk [vmem:[#allocation3 + $0x50] sm:$0xff] %vm584, %v801
          %920 = vst.msk [vmem:[#allocation3 + $0x58] sm:$0xff] %vm584, %v806
          %921 = vst.msk [vmem:[#allocation3 + $0x60] sm:$0xff] %vm584, %v811
          %922 = vst.msk [vmem:[#allocation3 + $0x68] sm:$0xff] %vm584, %v816
          %923 = vst.msk [vmem:[#allocation3 + $0x70] sm:$0xff] %vm584, %v821
          %924 = vst.msk [vmem:[#allocation3 + $0x78] sm:$0xff] %vm584, %v826
          %925 = vst.msk [vmem:[#allocation3 + $0x80] sm:$0xff] %vm584, %v831
          %926 = vst.msk [vmem:[#allocation3 + $0x88] sm:$0xff] %vm584, %v836
          %927 = vst.msk [vmem:[#allocation3 + $0x90] sm:$0xff] %vm584, %v841
          %928 = vst.msk [vmem:[#allocation3 + $0x98] sm:$0xff] %vm584, %v846
          %929 = vst.msk [vmem:[#allocation3 + $0xa0] sm:$0xff] %vm584, %v851
          %930 = vst.msk [vmem:[#allocation3 + $0xa8] sm:$0xff] %vm584, %v856
          %931 = vst.msk [vmem:[#allocation3 + $0xb0] sm:$0xff] %vm584, %v861
          %932 = vst.msk [vmem:[#allocation3 + $0xb8] sm:$0xff] %vm584, %v866
          %933 = vst.msk [vmem:[#allocation3 + $0xc0] sm:$0xff] %vm584, %v871
          %934 = vst.msk [vmem:[#allocation3 + $0xc8] sm:$0xff] %vm584, %v876
          %935 = vst.msk [vmem:[#allocation3 + $0xd0] sm:$0xff] %vm584, %v881
          %936 = vst.msk [vmem:[#allocation3 + $0xd8] sm:$0xff] %vm584, %v886
          %937 = vst.msk [vmem:[#allocation3 + $0xe0] sm:$0xff] %vm584, %v891
          %938 = vst.msk [vmem:[#allocation3 + $0xe8] sm:$0xff] %vm584, %v896
          %939 = vst.msk [vmem:[#allocation3 + $0xf0] sm:$0xff] %vm584, %v901
          %940 = vst.msk [vmem:[#allocation3 + $0xf8] sm:$0xff] %vm584, %v906
          %942 = vmatprep.subr.mxu0 0.0
          %943 = vmatpush1.msra.mxu0 %v751
          %944 = vmatprep.subr.mxu0 0.0
          %945 = vmatpush1.msra.mxu0 %v756
          %946 = vmatprep.subr.mxu0 0.0
          %947 = vmatpush1.msra.mxu0 %v761
          %948 = vmatprep.subr.mxu0 0.0
          %949 = vmatpush1.msra.mxu0 %v766
          %950 = vmatprep.subr.mxu0 0.0
          %951 = vmatpush1.msra.mxu0 %v771
          %952 = vmatprep.subr.mxu0 0.0
          %953 = vmatpush1.msra.mxu0 %v776
          %954 = vmatprep.subr.mxu0 0.0
          %955 = vmatpush1.msra.mxu0 %v781
          %956 = vmatprep.subr.mxu0 0.0
          %957 = vmatpush1.msra.mxu0 %v786
          %958 = vmatprep.subr.mxu0 0.0
          %959 = vmatpush1.msra.mxu0 %v791
          %960 = vmatprep.subr.mxu0 0.0
          %961 = vmatpush1.msra.mxu0 %v796
          %962 = vmatprep.subr.mxu0 0.0
          %963 = vmatpush1.msra.mxu0 %v801
          %964 = vmatprep.subr.mxu0 0.0
          %965 = vmatpush1.msra.mxu0 %v806
          %966 = vmatprep.subr.mxu0 0.0
          %967 = vmatpush1.msra.mxu0 %v811
          %968 = vmatprep.subr.mxu0 0.0
          %969 = vmatpush1.msra.mxu0 %v816
          %970 = vmatprep.subr.mxu0 0.0
          %971 = vmatpush1.msra.mxu0 %v821
          %972 = vmatprep.subr.mxu0 0.0
          %973 = vmatpush1.msra.mxu0 %v826
          %974 = vmatprep.subr.mxu0 0.0
          %975 = vmatpush1.msra.mxu0 %v831
          %976 = vmatprep.subr.mxu0 0.0
          %977 = vmatpush1.msra.mxu0 %v836
          %978 = vmatprep.subr.mxu0 0.0
          %979 = vmatpush1.msra.mxu0 %v841
          %980 = vmatprep.subr.mxu0 0.0
          %981 = vmatpush1.msra.mxu0 %v846
          %982 = vmatprep.subr.mxu0 0.0
          %983 = vmatpush1.msra.mxu0 %v851
          %984 = vmatprep.subr.mxu0 0.0
          %985 = vmatpush1.msra.mxu0 %v856
          %986 = vmatprep.subr.mxu0 0.0
          %987 = vmatpush1.msra.mxu0 %v861
          %988 = vmatprep.subr.mxu0 0.0
          %989 = vmatpush1.msra.mxu0 %v866
          %990 = vmatprep.subr.mxu0 0.0
          %991 = vmatpush1.msra.mxu0 %v871
          %992 = vmatprep.subr.mxu0 0.0
          %993 = vmatpush1.msra.mxu0 %v876
          %994 = vmatprep.subr.mxu0 0.0
          %995 = vmatpush1.msra.mxu0 %v881
          %996 = vmatprep.subr.mxu0 0.0
          %997 = vmatpush1.msra.mxu0 %v886
          %998 = vmatprep.subr.mxu0 0.0
          %999 = vmatpush1.msra.mxu0 %v891
          %1000 = vmatprep.subr.mxu0 0.0
          %1001 = vmatpush1.msra.mxu0 %v896
          %1002 = vmatprep.subr.mxu0 0.0
          %1003 = vmatpush1.msra.mxu0 %v901
          %1004 = vmatprep.subr.mxu0 0.0
          %1005 = vmatpush1.msra.mxu0 %v906
          %1006 = vmatprep.mubr.f32.mxu0 %v396
          %1007 = vmatmul.mubr.f32.gmra.mrb[0].mxu0 %v391
          %v1008 = vpop.f32.mrb[0].mxu0
          %v1009 = vadd.f32 0.0, %v1008
          %v1010 = vpop.f32.mrb[0].mxu0
          %1011 = vdwg.mxu0
          %v1012 = vld [vmem:[%s3] sm:$0xff]
          %v1013 = vld [vmem:[%s4] sm:$0xff]
          %v1015 = vsel %vm397, %v1012, 0
          %v1018 = vsel %vm401, %v1009, 0
          %1020 = vmatprep.subr.mxu0 0.0
          %1021 = vmatpush1.msra.mxu0 %v1018
          %1022 = vmatprep.subr.mxu0 0.0
          %1023 = vmatpush1.msra.mxu0 0.0
          %1024 = vmatprep.subr.mxu0 0.0
          %1025 = vmatpush1.msra.mxu0 0.0
          %1026 = vmatprep.subr.mxu0 0.0
          %1027 = vmatpush1.msra.mxu0 0.0
          %1028 = vmatprep.subr.mxu0 0.0
          %1029 = vmatpush1.msra.mxu0 0.0
          %1030 = vmatprep.subr.mxu0 0.0
          %1031 = vmatpush1.msra.mxu0 0.0
          %1032 = vmatprep.subr.mxu0 0.0
          %1033 = vmatpush1.msra.mxu0 0.0
          %1034 = vmatprep.subr.mxu0 0.0
          %1035 = vmatpush1.msra.mxu0 0.0
          %1036 = vmatprep.subr.mxu0 0.0
          %1037 = vmatpush1.msra.mxu0 0.0
          %1038 = vmatprep.subr.mxu0 0.0
          %1039 = vmatpush1.msra.mxu0 0.0
          %1040 = vmatprep.subr.mxu0 0.0
          %1041 = vmatpush1.msra.mxu0 0.0
          %1042 = vmatprep.subr.mxu0 0.0
          %1043 = vmatpush1.msra.mxu0 0.0
          %1044 = vmatprep.subr.mxu0 0.0
          %1045 = vmatpush1.msra.mxu0 0.0
          %1046 = vmatprep.subr.mxu0 0.0
          %1047 = vmatpush1.msra.mxu0 0.0
          %1048 = vmatprep.subr.mxu0 0.0
          %1049 = vmatpush1.msra.mxu0 0.0
          %1050 = vmatprep.subr.mxu0 0.0
          %1051 = vmatpush1.msra.mxu0 0.0
          %1052 = vmatprep.subr.mxu0 0.0
          %1053 = vmatpush1.msra.mxu0 0.0
          %1054 = vmatprep.subr.mxu0 0.0
          %1055 = vmatpush1.msra.mxu0 0.0
          %1056 = vmatprep.subr.mxu0 0.0
          %1057 = vmatpush1.msra.mxu0 0.0
          %1058 = vmatprep.subr.mxu0 0.0
          %1059 = vmatpush1.msra.mxu0 0.0
          %1060 = vmatprep.subr.mxu0 0.0
          %1061 = vmatpush1.msra.mxu0 0.0
          %1062 = vmatprep.subr.mxu0 0.0
          %1063 = vmatpush1.msra.mxu0 0.0
          %1064 = vmatprep.subr.mxu0 0.0
          %1065 = vmatpush1.msra.mxu0 0.0
          %1066 = vmatprep.subr.mxu0 0.0
          %1067 = vmatpush1.msra.mxu0 0.0
          %1068 = vmatprep.subr.mxu0 0.0
          %1069 = vmatpush1.msra.mxu0 0.0
          %1070 = vmatprep.subr.mxu0 0.0
          %1071 = vmatpush1.msra.mxu0 0.0
          %1072 = vmatprep.subr.mxu0 0.0
          %1073 = vmatpush1.msra.mxu0 0.0
          %1074 = vmatprep.subr.mxu0 0.0
          %1075 = vmatpush1.msra.mxu0 0.0
          %1076 = vmatprep.subr.mxu0 0.0
          %1077 = vmatpush1.msra.mxu0 0.0
          %1078 = vmatprep.subr.mxu0 0.0
          %1079 = vmatpush1.msra.mxu0 0.0
          %1080 = vmatprep.subr.mxu0 0.0
          %1081 = vmatpush1.msra.mxu0 0.0
          %1082 = vmatprep.subr.mxu0 0.0
          %1083 = vmatpush1.msra.mxu0 0.0
          %1084 = vmatprep.mubr.f32.mxu0 0.0
          %1085 = vmatmul.mubr.f32.gmra.mrb[0].mxu0 %v1015
          %v1086 = vpop.f32.mrb[0].mxu0
          %v1087 = vadd.f32 %v1013, %v1086
          %v1088 = vpop.f32.mrb[0].mxu0
          %1089 = vdwg.mxu0
          %v1090 = vsel %vm584, %v1087, 0.0
          %1091 = vadd.xlane.f32.xlu0 %v1090
          %v1092 = vpop.xlane.xlu0 %1091
          %v1093 = vrot.slane %v1092, 4
          %v1094 = vadd.f32 %v1092, %v1093
          %v1095 = vrot.slane %v1094, 2
          %v1096 = vadd.f32 %v1094, %v1095
          %v1097 = vrot.slane %v1096, 1
          %v1098 = vadd.f32 %v1096, %v1097
          %s1099 = vtos %v1098
          %v1100 = vstv %s1099
          %v1101 = vrcp.pop 8.0
          %v1102 = vmul.f32 %v1100, %v1101
          %v1103 = vsub.f32 %v1087, %v1102
          %v1104 = vmul.f32 %v1103, %v1103
          %v1105 = vsel %vm584, %v1104, 0.0
          %1106 = vadd.xlane.f32.xlu0 %v1105
          %v1107 = vpop.xlane.xlu0 %1106
          %v1108 = vrot.slane %v1107, 4
          %v1109 = vadd.f32 %v1107, %v1108
          %v1110 = vrot.slane %v1109, 2
          %v1111 = vadd.f32 %v1109, %v1110
          %v1112 = vrot.slane %v1111, 1
          %v1113 = vadd.f32 %v1111, %v1112
          %s1114 = vtos %v1113
          %v1115 = vstv %s1114
          %v1116 = vmul.f32 %v1115, %v1101
          %v1117 = vadd.f32 %v1116, 1e-05
          %v1118 = vrsqrt.pop %v1117
          %v1119 = vmul.f32 %v1103, %v1118
          %v1120 = vld [vmem:[%s5] sm:$0xff]
          %v1121 = vmul.f32 %v1119, %v1120
          %v1122 = vld [vmem:[%s6] sm:$0xff]
          %v1123 = vadd.f32 %v1121, %v1122
          %v1124 = vmax.f32 %v1123, 0.0
          %v1125 = vld [vmem:[%s7] sm:$0xf]
          %v1126 = vld [vmem:[%s8] sm:$0xf]
          %vm1127 = vcmask 64512
          %v1129 = vsel %vm1127, %v1125, 0
          %1131 = vmatprep.subr.mxu0 0.0
          %1132 = vmatpush1.msra.mxu0 %v1124
          %1133 = vmatprep.subr.mxu0 0.0
          %1134 = vmatpush1.msra.mxu0 0.0
          %1135 = vmatprep.subr.mxu0 0.0
          %1136 = vmatpush1.msra.mxu0 0.0
          %1137 = vmatprep.subr.mxu0 0.0
          %1138 = vmatpush1.msra.mxu0 0.0
          %1139 = vmatprep.subr.mxu0 0.0
          %1140 = vmatpush1.msra.mxu0 0.0
          %1141 = vmatprep.subr.mxu0 0.0
          %1142 = vmatpush1.msra.mxu0 0.0
          %1143 = vmatprep.subr.mxu0 0.0
          %1144 = vmatpush1.msra.mxu0 0.0
          %1145 = vmatprep.subr.mxu0 0.0
          %1146 = vmatpush1.msra.mxu0 0.0
          %1147 = vmatprep.subr.mxu0 0.0
          %1148 = vmatpush1.msra.mxu0 0.0
          %1149 = vmatprep.subr.mxu0 0.0
          %1150 = vmatpush1.msra.mxu0 0.0
          %1151 = vmatprep.subr.mxu0 0.0
          %1152 = vmatpush1.msra.mxu0 0.0
          %1153 = vmatprep.subr.mxu0 0.0
          %1154 = vmatpush1.msra.mxu0 0.0
          %1155 = vmatprep.subr.mxu0 0.0
          %1156 = vmatpush1.msra.mxu0 0.0
          %1157 = vmatprep.subr.mxu0 0.0
          %1158 = vmatpush1.msra.mxu0 0.0
          %1159 = vmatprep.subr.mxu0 0.0
          %1160 = vmatpush1.msra.mxu0 0.0
          %1161 = vmatprep.subr.mxu0 0.0
          %1162 = vmatpush1.msra.mxu0 0.0
          %1163 = vmatprep.subr.mxu0 0.0
          %1164 = vmatpush1.msra.mxu0 0.0
          %1165 = vmatprep.subr.mxu0 0.0
          %1166 = vmatpush1.msra.mxu0 0.0
          %1167 = vmatprep.subr.mxu0 0.0
          %1168 = vmatpush1.msra.mxu0 0.0
          %1169 = vmatprep.subr.mxu0 0.0
          %1170 = vmatpush1.msra.mxu0 0.0
          %1171 = vmatprep.subr.mxu0 0.0
          %1172 = vmatpush1.msra.mxu0 0.0
          %1173 = vmatprep.subr.mxu0 0.0
          %1174 = vmatpush1.msra.mxu0 0.0
          %1175 = vmatprep.subr.mxu0 0.0
          %1176 = vmatpush1.msra.mxu0 0.0
          %1177 = vmatprep.subr.mxu0 0.0
          %1178 = vmatpush1.msra.mxu0 0.0
          %1179 = vmatprep.subr.mxu0 0.0
          %1180 = vmatpush1.msra.mxu0 0.0
          %1181 = vmatprep.subr.mxu0 0.0
          %1182 = vmatpush1.msra.mxu0 0.0
          %1183 = vmatprep.subr.mxu0 0.0
          %1184 = vmatpush1.msra.mxu0 0.0
          %1185 = vmatprep.subr.mxu0 0.0
          %1186 = vmatpush1.msra.mxu0 0.0
          %1187 = vmatprep.subr.mxu0 0.0
          %1188 = vmatpush1.msra.mxu0 0.0
          %1189 = vmatprep.subr.mxu0 0.0
          %1190 = vmatpush1.msra.mxu0 0.0
          %1191 = vmatprep.subr.mxu0 0.0
          %1192 = vmatpush1.msra.mxu0 0.0
          %1193 = vmatprep.subr.mxu0 0.0
          %1194 = vmatpush1.msra.mxu0 0.0
          %1195 = vmatprep.mubr.f32.mxu0 0.0
          %1196 = vmatmul.mubr.f32.gmra.mrb[0].mxu0 %v1129
          %v1197 = vpop.f32.mrb[0].mxu0
          %v1198 = vadd.f32 %v1126, %v1197
          %v1199 = vpop.f32.mrb[0].mxu0
          %1200 = vdwg.mxu0
          %1202 = vset.pattern.permute.xlu0 0
          %1203 = vperm.xlu0 %1202, %v1198
          %v1204 = vpop.permute.xlu0 %1203
          %v1206 = vunpack.c.l.s4 839922192
          %v1207 = vunpack.c.0.s8 %v1206
          %v1208 = vlaneseq
          %v1209 = vshrl.u32 %v1208, 7
          %v1210 = vsub.s32 %v1207, %v1209
          %v1211 = vrot.slane %v1204, %v1210
          %v1213 = vadd.f32 %v391, %v1211
          %1214 = vst [vmem:[%s385] sm:$0xff] %v1213
        $region60: #{_context_block_2d.1} parent=55 // pred_fallthru
          _
        %s1215 = smul.u32 %s31, 128
        %s1216 = scalar_lea.vmem [#allocation3], %s1215
        %v1217 = vld [vmem:[%s1216] sm:$0xff]
        %v1218 = vld [vmem:[%s1216 + $0x8] sm:$0xff]
        %v1219 = vld [vmem:[%s1216 + $0x10] sm:$0xff]
        %v1220 = vld [vmem:[%s1216 + $0x18] sm:$0xff]
        %v1221 = vld [vmem:[%s1216 + $0x20] sm:$0xff]
        %v1222 = vld [vmem:[%s1216 + $0x28] sm:$0xff]
        %v1223 = vld [vmem:[%s1216 + $0x30] sm:$0xff]
        %v1224 = vld [vmem:[%s1216 + $0x38] sm:$0xff]
        %v1225 = vld [vmem:[%s1216 + $0x40] sm:$0xff]
        %v1226 = vld [vmem:[%s1216 + $0x48] sm:$0xff]
        %v1227 = vld [vmem:[%s1216 + $0x50] sm:$0xff]
        %v1228 = vld [vmem:[%s1216 + $0x58] sm:$0xff]
        %v1229 = vld [vmem:[%s1216 + $0x60] sm:$0xff]
        %v1230 = vld [vmem:[%s1216 + $0x68] sm:$0xff]
        %v1231 = vld [vmem:[%s1216 + $0x70] sm:$0xff]
        %v1232 = vld [vmem:[%s1216 + $0x78] sm:$0xff]
        %v1233 = vld [vmem:[#allocation2] sm:$0x3]
        %1235 = vset.pattern.permute.xlu0 0
        %1236 = vperm.xlu0 %1235, %v1217
        %v1237 = vpop.permute.xlu0 %1236
        %1240 = vset.pattern.permute.xlu0 0
        %1241 = vperm.xlu0 %1240, %v1218
        %v1242 = vpop.permute.xlu0 %1241
        %1245 = vset.pattern.permute.xlu0 0
        %1246 = vperm.xlu0 %1245, %v1219
        %v1247 = vpop.permute.xlu0 %1246
        %1250 = vset.pattern.permute.xlu0 0
        %1251 = vperm.xlu0 %1250, %v1220
        %v1252 = vpop.permute.xlu0 %1251
        %1255 = vset.pattern.permute.xlu0 0
        %1256 = vperm.xlu0 %1255, %v1221
        %v1257 = vpop.permute.xlu0 %1256
        %1260 = vset.pattern.permute.xlu0 0
        %1261 = vperm.xlu0 %1260, %v1222
        %v1262 = vpop.permute.xlu0 %1261
        %1265 = vset.pattern.permute.xlu0 0
        %1266 = vperm.xlu0 %1265, %v1223
        %v1267 = vpop.permute.xlu0 %1266
        %1270 = vset.pattern.permute.xlu0 0
        %1271 = vperm.xlu0 %1270, %v1224
        %v1272 = vpop.permute.xlu0 %1271
        %1275 = vset.pattern.permute.xlu0 0
        %1276 = vperm.xlu0 %1275, %v1225
        %v1277 = vpop.permute.xlu0 %1276
        %1280 = vset.pattern.permute.xlu0 0
        %1281 = vperm.xlu0 %1280, %v1226
        %v1282 = vpop.permute.xlu0 %1281
        %1285 = vset.pattern.permute.xlu0 0
        %1286 = vperm.xlu0 %1285, %v1227
        %v1287 = vpop.permute.xlu0 %1286
        %1290 = vset.pattern.permute.xlu0 0
        %1291 = vperm.xlu0 %1290, %v1228
        %v1292 = vpop.permute.xlu0 %1291
        %1295 = vset.pattern.permute.xlu0 0
        %1296 = vperm.xlu0 %1295, %v1229
        %v1297 = vpop.permute.xlu0 %1296
        %1300 = vset.pattern.permute.xlu0 0
        %1301 = vperm.xlu0 %1300, %v1230
        %v1302 = vpop.permute.xlu0 %1301
        %1305 = vset.pattern.permute.xlu0 0
        %1306 = vperm.xlu0 %1305, %v1231
        %v1307 = vpop.permute.xlu0 %1306
        %1310 = vset.pattern.permute.xlu0 0
        %1311 = vperm.xlu0 %1310, %v1232
        %v1312 = vpop.permute.xlu0 %1311
        %v1315 = vlaneseq
        %v1316 = vshrl.u32 %v1315, 7
        %v1317 = vsub.s32 0, %v1316
        %v1318 = vrot.slane %v1233, %v1317
        %v1319 = vlaneseq
        %v1320 = vshrl.u32 %v1319, 7
        %v1321 = vsub.s32 1, %v1320
        %v1322 = vrot.slane %v1233, %v1321
        %v1325 = vmul.f32 %v1237, %v1318
        %v1326 = vmul.f32 %v1237, %v1322
        %v1327 = vmul.f32 %v1242, %v1318
        %v1328 = vmul.f32 %v1242, %v1322
        %v1329 = vmul.f32 %v1247, %v1318
        %v1330 = vmul.f32 %v1247, %v1322
        %v1331 = vmul.f32 %v1252, %v1318
        %v1332 = vmul.f32 %v1252, %v1322
        %v1333 = vmul.f32 %v1257, %v1318
        %v1334 = vmul.f32 %v1257, %v1322
        %v1335 = vmul.f32 %v1262, %v1318
        %v1336 = vmul.f32 %v1262, %v1322
        %v1337 = vmul.f32 %v1267, %v1318
        %v1338 = vmul.f32 %v1267, %v1322
        %v1339 = vmul.f32 %v1272, %v1318
        %v1340 = vmul.f32 %v1272, %v1322
        %v1341 = vmul.f32 %v1277, %v1318
        %v1342 = vmul.f32 %v1277, %v1322
        %v1343 = vmul.f32 %v1282, %v1318
        %v1344 = vmul.f32 %v1282, %v1322
        %v1345 = vmul.f32 %v1287, %v1318
        %v1346 = vmul.f32 %v1287, %v1322
        %v1347 = vmul.f32 %v1292, %v1318
        %v1348 = vmul.f32 %v1292, %v1322
        %v1349 = vmul.f32 %v1297, %v1318
        %v1350 = vmul.f32 %v1297, %v1322
        %v1351 = vmul.f32 %v1302, %v1318
        %v1352 = vmul.f32 %v1302, %v1322
        %v1353 = vmul.f32 %v1307, %v1318
        %v1354 = vmul.f32 %v1307, %v1322
        %v1355 = vmul.f32 %v1312, %v1318
        %v1356 = vmul.f32 %v1312, %v1322
        %1357 = vst [vmem:[%s375] sm:$0xff] %v1325
        %1358 = vst [vmem:[%s375 + $0x8] sm:$0xff] %v1326
        %1359 = vst [vmem:[%s375 + $0x10] sm:$0xff] %v1327
        %1360 = vst [vmem:[%s375 + $0x18] sm:$0xff] %v1328
        %1361 = vst [vmem:[%s375 + $0x20] sm:$0xff] %v1329
        %1362 = vst [vmem:[%s375 + $0x28] sm:$0xff] %v1330
        %1363 = vst [vmem:[%s375 + $0x30] sm:$0xff] %v1331
        %1364 = vst [vmem:[%s375 + $0x38] sm:$0xff] %v1332
        %1365 = vst [vmem:[%s375 + $0x40] sm:$0xff] %v1333
        %1366 = vst [vmem:[%s375 + $0x48] sm:$0xff] %v1334
        %1367 = vst [vmem:[%s375 + $0x50] sm:$0xff] %v1335
        %1368 = vst [vmem:[%s375 + $0x58] sm:$0xff] %v1336
        %1369 = vst [vmem:[%s375 + $0x60] sm:$0xff] %v1337
        %1370 = vst [vmem:[%s375 + $0x68] sm:$0xff] %v1338
        %1371 = vst [vmem:[%s375 + $0x70] sm:$0xff] %v1339
        %1372 = vst [vmem:[%s375 + $0x78] sm:$0xff] %v1340
        %1373 = vst [vmem:[%s375 + $0x80] sm:$0xff] %v1341
        %1374 = vst [vmem:[%s375 + $0x88] sm:$0xff] %v1342
        %1375 = vst [vmem:[%s375 + $0x90] sm:$0xff] %v1343
        %1376 = vst [vmem:[%s375 + $0x98] sm:$0xff] %v1344
        %1377 = vst [vmem:[%s375 + $0xa0] sm:$0xff] %v1345
        %1378 = vst [vmem:[%s375 + $0xa8] sm:$0xff] %v1346
        %1379 = vst [vmem:[%s375 + $0xb0] sm:$0xff] %v1347
        %1380 = vst [vmem:[%s375 + $0xb8] sm:$0xff] %v1348
        %1381 = vst [vmem:[%s375 + $0xc0] sm:$0xff] %v1349
        %1382 = vst [vmem:[%s375 + $0xc8] sm:$0xff] %v1350
        %1383 = vst [vmem:[%s375 + $0xd0] sm:$0xff] %v1351
        %1384 = vst [vmem:[%s375 + $0xd8] sm:$0xff] %v1352
        %1385 = vst [vmem:[%s375 + $0xe0] sm:$0xff] %v1353
        %1386 = vst [vmem:[%s375 + $0xe8] sm:$0xff] %v1354
        %1387 = vst [vmem:[%s375 + $0xf0] sm:$0xff] %v1355
        %1388 = vst [vmem:[%s375 + $0xf8] sm:$0xff] %v1356
        %p1389 = scmp.lt.s32.totalorder %s30, 1
        %s1390 = scalar_select %p1389, %s30, 1
        %s1391 = smul.addr %s1390, 2
        %s1392 = smul.addr %s1391, 4
        %s1393 = scalar_lea.vmem %s9, %s1392
        %s1394 = sand.u32 %s268, 1
        %s1395 = scalar_lea.sflag [#allocation6], %s1394
        %s1396 = sand.u32 %s268, 1
        %s1397 = smul.addr %s1396, 256
        %s1398 = scalar_lea.vmem [#allocation5], %s1397
        // Predicated region
        $region61: #{_context_block_2d.1} parent=55 // pred_check
          %p1399 = pneg %p250
        $region62: #{_context_block_2d.1} parent=55 // pred_check_branch
          %1401 = sbr.rel (%p1399) target = $region64
        $region63: #{_context_block_2d.1} parent=55 // pred_region
          _
        $region64: #{_context_block_2d.1} parent=55 // pred_fallthru
          _
        // Predicated region
        $region65: #{_context_block_2d.1} parent=55 // pred_check
          %p1402 = pneg %p278
        $region66: #{_context_block_2d.1} parent=55 // pred_check_branch
          %1404 = sbr.rel (%p1402) target = $region68
        $region67: #{_context_block_2d.1} parent=55 // pred_region
          %s1405 = smul.u32 16, %s31
          %s1407 = ssub.s32 4096, 4096
          %1408 = vsyncadd %s1395, %s1407
          %s1409 = smul.addr %s1405, 2
          %s1410 = smul.addr %s30, 64
          %s1411 = sadd.s32 %s1409, %s1410
          %s1412 = smul.addr %s1411, 128
          %s1413 = scalar_lea.hbm %s10, %s1412
          %s1414 = sshll.u32 %s1398, 4
          %s1415 = int_to_ptr.vmem [resolvable:$true] %s1414
          %1420 = dma.vmem_to_hbm [thread:$0]  %s1415, 4096, %s1413, %s1395, 256, 256, 16
        $region68: #{_context_block_2d.1} parent=55 // pred_fallthru
          _
      $region56: #{_context_block_2d.1} parent=5 // pred_fallthru
        _
      %p1421 = scmp.le.s32.totalorder 2, %s21
      // Predicated region
      $region69: #{_context_block_2d.1} parent=5 // pred_check
        %p1422 = pneg %p1421
      $region70: #{_context_block_2d.1} parent=5 // pred_check_branch
        %1424 = sbr.rel (%p1422) target = $region72
      $region71: #{_context_block_2d.1} parent=5 // pred_region
        %s1425 = ssub.s32 %s21, 2
        // Predicated region
        $region73: #{_context_block_2d.1} parent=71 // pred_check
          %p1426 = pneg %p256
        $region74: #{_context_block_2d.1} parent=71 // pred_check_branch
          %1428 = sbr.rel (%p1426) target = $region76
        $region75: #{_context_block_2d.1} parent=71 // pred_region
          %p1429 = scmp.lt.s32.totalorder %s32, 1
          %s1430 = scalar_select %p1429, %s32, 1
          %s1431 = smul.addr %s1430, 2
          %s1432 = smul.addr %s1431, 4
          %s1433 = scalar_lea.vmem %s9, %s1432
        $region76: #{_context_block_2d.1} parent=71 // pred_fallthru
          _
        // Predicated region
        $region77: #{_context_block_2d.1} parent=71 // pred_check
          %p1434 = pneg %p284
        $region78: #{_context_block_2d.1} parent=71 // pred_check_branch
          %1436 = sbr.rel (%p1434) target = $region80
        $region79: #{_context_block_2d.1} parent=71 // pred_region
          %s1437 = sand.u32 %s269, 1
          %s1438 = scalar_lea.sflag [#allocation6], %s1437
          %s1439 = sand.u32 %s269, 1
          %s1440 = smul.addr %s1439, 256
          %s1441 = scalar_lea.vmem [#allocation5], %s1440
          %1442 = dma.done %s1438, 4096
        $region80: #{_context_block_2d.1} parent=71 // pred_fallthru
          _
      $region72: #{_context_block_2d.1} parent=5 // pred_fallthru
        _
    $region6: #{_context_block_2d.1} parent=1 // loop_footer
      %s25 = sadd.s32 1, %s21
    $region7: #{_context_block_2d.1} parent=1 // loop_footer_branch
      %20 = sbr.rel target = $region3
    $region8: #{_context_block_2d.1} parent=1 // loop_exit
      _
    %1443 = vsyncpa [#allocation6], 1
    %s1444 = scalar_lea.sflag [#allocation6], 1
    %1445 = vsyncpa %s1444, 1

</llo_original>
